<compile_context>
chip_gen: v5e
topology: v5e:2x2
jax: 0.10.0
libtpu: 0.0.40
codegen_flags: <defaults>
</compile_context>

<pallas_src>
import numpy as np
import jax
import jax.numpy as jnp
from jax import lax
from jax.experimental import pallas as pl
from jax.experimental.pallas import tpu as pltpu

# ---- module-level hyperparameters (globals in the original script) ----------
N_FINGERPRINT = 50
DIM = 32
HIDDEN_LAYER = 2
OUTPUT_LAYER = 2
UPDATE = "sum"    # 'sum' or 'mean'
OUTPUT = "mean"   # 'sum' or 'mean'

# ---- kernel tiling parameters ------------------------------------------------
TILE_N = 256      # nodes per tile (full 256-wide MXU on v6e/v7x; 2x128 on v5e)
TILE_B = 32       # max molecules per tile (sublane-aligned)
DHP = 128         # head width DIM+2=34 zero-padded to one full 128-lane slab


# ------------------------------ fused Pallas kernel ---------------------------
def _gnn_tile_kernel(x_ref, adjT_ref, minv_ref, wtT_ref, bT_ref,
                     pool_ref, invsz_ref, dock_ref,
                     wd0_ref, wm0_ref, w_rest_ref, b_out_ref, wp_ref, bp_ref,
                     out_ref):
    """One independent molecule-tile of the whole GNN forward.

    Transposed (lane-dense) GNN layers:
        hs  = relu(W_i^T @ x + b_i)                [DIM, TILE_N]
        x  += (hs @ A^T) * minv                    (minv: f32 mean/pad scaling)
    Pooling (0/1 indicator matmul + f32 1/size scale), then the padded head:
        y   = relu(dock outer-product + mol @ Wm0 + b0)   (concat eliminated)
        y   = relu(y @ W_j + b_j)                  remaining output layers
        out = y @ Wp + bp                          lane-dense [TILE_B, 128] store
    """
    x = x_ref[0]                                   # [DIM, TILE_N]  f32
    adjT = adjT_ref[0]                             # [TILE_N, TILE_N] bf16 (0/1)
    minv = minv_ref[0]                             # [1, TILE_N]    f32

    for i in range(HIDDEN_LAYER):                  # static unrolled loop
        hs = jnp.maximum(
            jnp.dot(wtT_ref[i], x.astype(jnp.bfloat16),
                    preferred_element_type=jnp.float32) + bT_ref[i],
            0.0)                                   # [DIM, TILE_N] f32
        upd = jnp.dot(hs.astype(jnp.bfloat16), adjT,
                      preferred_element_type=jnp.float32)
        x = x + upd * minv                         # f32 VPU scale + residual

    # per-molecule pooling: 0/1 indicator contraction over the node/lane axis,
    # then the 1/size 'mean' scale as an f32 VPU multiply.
    mol = lax.dot_general(pool_ref[0], x.astype(jnp.bfloat16),
                          (((1,), (1,)), ((), ())),
                          preferred_element_type=jnp.float32)   # [TILE_B, DIM]
    mol = mol * invsz_ref[0]                                    # [TILE_B, 1]

    # first output layer: concat(dock, mol) @ W0  ==  dock-outer-product + mol @ Wm0
    dock = dock_ref[0]                                          # [TILE_B, 2] f32
    y = (dock[:, 0:1] * wd0_ref[0:1, :]
         + dock[:, 1:2] * wd0_ref[1:2, :]
         + jnp.dot(mol.astype(jnp.bfloat16), wm0_ref[...],
                   preferred_element_type=jnp.float32)
         + b_out_ref[0])
    y = jnp.maximum(y, 0.0)                                     # [TILE_B, DHP]
    for j in range(1, OUTPUT_LAYER):
        y = jnp.maximum(
            jnp.dot(y.astype(jnp.bfloat16), w_rest_ref[j - 1],
                    preferred_element_type=jnp.float32) + b_out_ref[j],
            0.0)

    # property head, zero-padded to 128 output lanes -> unmasked lane-dense store
    out_ref[0] = (jnp.dot(y.astype(jnp.bfloat16), wp_ref[...],
                          preferred_element_type=jnp.float32) + bp_ref[...])


def gnn_forward(x_tiles, adjT_tiles, minv_tiles, wtT, bT,
                pool_tiles, invsz_tiles, dock_tiles,
                wd0, wm0, w_rest, b_out, wp_pad, bp_pad):
    """Single pallas_call over a 1-D grid of independent molecule tiles."""
    T = x_tiles.shape[0]

    def tiled(shape):
        return pl.BlockSpec((1,) + tuple(shape[1:]), lambda t: (t, 0, 0))

    def replicated(arr):
        nd = arr.ndim
        return pl.BlockSpec(tuple(arr.shape), lambda t, nd=nd: (0,) * nd)

    in_specs = [
        tiled(x_tiles.shape), tiled(adjT_tiles.shape), tiled(minv_tiles.shape),
        replicated(wtT), replicated(bT),
        tiled(pool_tiles.shape), tiled(invsz_tiles.shape), tiled(dock_tiles.shape),
        replicated(wd0), replicated(wm0), replicated(w_rest),
        replicated(b_out), replicated(wp_pad), replicated(bp_pad),
    ]
    out_specs = pl.BlockSpec((1, TILE_B, DHP), lambda t: (t, 0, 0))
    out_shape = jax.ShapeDtypeStruct((T, TILE_B, DHP), jnp.float32)

    args = (x_tiles, adjT_tiles, minv_tiles, wtT, bT,
            pool_tiles, invsz_tiles, dock_tiles,
            wd0, wm0, w_rest, b_out, wp_pad, bp_pad)

    tile_flops = (
        HIDDEN_LAYER * (2 * DIM * DIM * TILE_N + 2 * DIM * TILE_N * TILE_N)
        + 2 * TILE_B * TILE_N * DIM
        + 2 * TILE_B * DIM * DHP
        + (OUTPUT_LAYER - 1) * 2 * TILE_B * DHP * DHP
        + 2 * TILE_B * DHP * DHP)
    bytes_accessed = int(
        sum(int(np.prod(a.shape)) * a.dtype.itemsize for a in args)
        + T * TILE_B * DHP * 4)

    return pl.pallas_call(
        _gnn_tile_kernel,
        grid=(T,),
        in_specs=in_specs,
        out_specs=out_specs,
        out_shape=out_shape,
        compiler_params=pltpu.CompilerParams(
            dimension_semantics=("parallel",)),          # tiles are independent
        cost_estimate=pl.CostEstimate(flops=int(T * tile_flops),
                                      transcendentals=0,
                                      bytes_accessed=bytes_accessed),
    )(*args)


# --------------------------- pure-JAX reference (original semantics) ----------
def reference(x, adj, M, pool_flat, wt, b_fp, docking, wo, bo, wp, bp):
    for i in range(HIDDEN_LAYER):
        hs = jax.nn.relu(x @ wt[i] + b_fp[i])
        upd = adj @ hs
        x = x + (upd if UPDATE == "sum" else upd / (M - 1.0))
    mol = pool_flat @ x                           # per-molecule sum/mean
    y = jnp.concatenate([docking, mol], axis=1)
    for j in range(OUTPUT_LAYER):
        y = jax.nn.relu(y @ wo[j] + bo[j])
    return y @ wp + bp


# ------------------------------------ main ------------------------------------
if __name__ == "__main__":
    key = jax.random.PRNGKey(0)
    keys = jax.random.split(key, 10)
    rng = np.random.default_rng(0)

    # ----- synthetic ragged molecule batch -----
    B = 96
    sizes = rng.integers(4, 13, size=B)           # nodes per molecule (4..12)
    assert int(sizes.max()) <= TILE_N
    N = int(sizes.sum())

    fp_cat = jax.random.randint(keys[0], (N,), 0, N_FINGERPRINT, dtype=jnp.int32)
    dock_np = np.asarray(jax.random.normal(keys[1], (B, 2), dtype=jnp.float32))

    adj_blocks = []
    for s in sizes:
        a = (rng.random((int(s), int(s))) < 0.4).astype(np.float32)
        a = np.maximum(a, a.T)
        np.fill_diagonal(a, 1.0)
        adj_blocks.append(a)

    # ----- deterministic synthetic parameters -----
    embed_table = 0.1 * jax.random.normal(keys[2], (N_FINGERPRINT, DIM), jnp.float32)
    wt = 0.1 * jax.random.normal(keys[3], (HIDDEN_LAYER, DIM, DIM), jnp.float32)
    b_fp = 0.1 * jax.random.normal(keys[4], (HIDDEN_LAYER, 1, DIM), jnp.float32)
    wo = 0.1 * jax.random.normal(keys[5], (OUTPUT_LAYER, DIM + 2, DIM + 2), jnp.float32)
    bo = 0.1 * jax.random.normal(keys[6], (OUTPUT_LAYER, 1, DIM + 2), jnp.float32)
    wp = 0.1 * jax.random.normal(keys[7], (DIM + 2, 2), jnp.float32)
    bp = 0.1 * jax.random.normal(keys[8], (1, 2), jnp.float32)

    # embedding lookup (glue, outside the kernel)
    # TODO(synk): the nn.Embedding gather stays as jnp.take glue; a scalar-prefetch
    # row-gather BlockSpec could fuse it into the kernel as well.
    emb_all = np.asarray(jnp.take(embed_table, fp_cat, axis=0))   # [N, DIM]

    # ----- pack whole molecules into independent tiles (block-diagonal tiling) --
    tiles, cur, cur_nodes = [], [], 0
    for b in range(B):
        s = int(sizes[b])
        if cur and (cur_nodes + s > TILE_N or len(cur) >= TILE_B):
            tiles.append(cur)
            cur, cur_nodes = [], 0
        cur.append(b)
        cur_nodes += s
    if cur:
        tiles.append(cur)
    T = len(tiles)

    x_tiles = np.zeros((T, DIM, TILE_N), np.float32)
    adjT_tiles = np.zeros((T, TILE_N, TILE_N), np.float32)
    minv_tiles = np.zeros((T, 1, TILE_N), np.float32)
    pool_tiles = np.zeros((T, TILE_B, TILE_N), np.float32)
    invsz_tiles = np.zeros((T, TILE_B, 1), np.float32)
    dock_tiles = np.zeros((T, TILE_B, 2), np.float32)
    mol_tile = np.zeros(B, np.int64)
    mol_slot = np.zeros(B, np.int64)

    node_off_flat = np.concatenate([[0], np.cumsum(sizes)]).astype(np.int64)
    for t, mols in enumerate(tiles):
        off = 0
        for slot, b in enumerate(mols):
            s = int(sizes[b])
            fo = int(node_off_flat[b])
            x_tiles[t, :, off:off + s] = emb_all[fo:fo + s].T
            adjT_tiles[t, off:off + s, off:off + s] = adj_blocks[b].T
            # 'mean' update scale guarded for single-node molecules (orig would inf)
            minv_tiles[t, 0, off:off + s] = (
                1.0 if UPDATE == "sum" else 1.0 / max(s - 1, 1))
            pool_tiles[t, slot, off:off + s] = 1.0
            invsz_tiles[t, slot, 0] = (1.0 / s) if OUTPUT == "mean" else 1.0
            dock_tiles[t, slot, :] = dock_np[b]
            mol_tile[b] = t
            mol_slot[b] = slot
            off += s

    # ----- kernel-side parameter layouts (transposed / lane-padded / bf16) -----
    DH = DIM + 2
    wtT = jnp.transpose(wt, (0, 2, 1)).astype(jnp.bfloat16)        # [H, DIM, DIM]
    bT = jnp.transpose(b_fp, (0, 2, 1))                            # [H, DIM, 1] f32
    wd0 = jnp.zeros((2, DHP), jnp.float32).at[:, :DH].set(wo[0, :2, :])
    wm0 = jnp.zeros((DIM, DHP), jnp.bfloat16).at[:, :DH].set(
        wo[0, 2:, :].astype(jnp.bfloat16))
    w_rest = jnp.zeros((OUTPUT_LAYER - 1, DHP, DHP), jnp.bfloat16).at[
        :, :DH, :DH].set(wo[1:].astype(jnp.bfloat16))
    b_out = jnp.zeros((OUTPUT_LAYER, 1, DHP), jnp.float32).at[:, :, :DH].set(bo)
    wp_pad = jnp.zeros((DHP, DHP), jnp.bfloat16).at[:DH, :2].set(
        wp.astype(jnp.bfloat16))
    bp_pad = jnp.zeros((1, DHP), jnp.float32).at[:, :2].set(bp)

    # ----- run fused tiled kernel -----
    pred_tiles = gnn_forward(
        jnp.asarray(x_tiles),
        jnp.asarray(adjT_tiles, dtype=jnp.bfloat16),   # 0/1 -> exact in bf16
        jnp.asarray(minv_tiles),
        wtT, bT,
        jnp.asarray(pool_tiles, dtype=jnp.bfloat16),   # 0/1 -> exact in bf16
        jnp.asarray(invsz_tiles),
        jnp.asarray(dock_tiles),
        wd0, wm0, w_rest, b_out, wp_pad, bp_pad)
    pred_tiles = jax.block_until_ready(pred_tiles)
    # gather real molecules (padded slots carry relu(b0)-garbage, sliced off here)
    pred = np.asarray(pred_tiles)[mol_tile, mol_slot, :2]          # [B, 2]

    # ----- pure-JAX f32 reference with the original (unfused, flat) semantics ---
    adj_flat = np.zeros((N, N), np.float32)
    pool_flat = np.zeros((B, N), np.float32)
    for b in range(B):
        fo = int(node_off_flat[b])
        s = int(sizes[b])
        adj_flat[fo:fo + s, fo:fo + s] = adj_blocks[b]
        pool_flat[b, fo:fo + s] = (1.0 / s) if OUTPUT == "mean" else 1.0
    M_flat = np.concatenate(
        [np.repeat(int(s), int(s)) for s in sizes]).astype(np.float32)[:, None]

    ref = np.asarray(reference(jnp.asarray(emb_all), jnp.asarray(adj_flat),
                               jnp.asarray(M_flat), jnp.asarray(pool_flat),
                               wt, b_fp, jnp.asarray(dock_np), wo, bo, wp, bp))

    # bf16 MXU operands (f32 accumulation) vs f32 reference -> ~0.5%-level match
    np.testing.assert_allclose(pred, ref, rtol=5e-2, atol=5e-2)

    # mimic __call__ post-processing (plain JAX glue): softmax -> labels/scores
    ys = jax.nn.softmax(jnp.asarray(pred), axis=1)
    _labels = np.argmax(np.asarray(ys), axis=1)
    _scores = np.asarray(ys)[:, 1]

    print("KERNEL_OK")
</pallas_src>

<mosaic_0001>
module attributes {stable_mosaic.version = 11 : i64} {
  func.func @_gnn_tile_kernel(%arg0: i32, %arg1: memref<1x32x256xf32, #tpu.memory_space<vmem>>, %arg2: memref<1x256x256xbf16, #tpu.memory_space<vmem>>, %arg3: memref<1x1x256xf32, #tpu.memory_space<vmem>>, %arg4: memref<2x32x32xbf16, #tpu.memory_space<vmem>>, %arg5: memref<2x32x1xf32, #tpu.memory_space<vmem>>, %arg6: memref<1x32x256xbf16, #tpu.memory_space<vmem>>, %arg7: memref<1x32x1xf32, #tpu.memory_space<vmem>>, %arg8: memref<1x32x2xf32, #tpu.memory_space<vmem>>, %arg9: memref<2x128xf32, #tpu.memory_space<vmem>>, %arg10: memref<32x128xbf16, #tpu.memory_space<vmem>>, %arg11: memref<1x128x128xbf16, #tpu.memory_space<vmem>>, %arg12: memref<2x1x128xf32, #tpu.memory_space<vmem>>, %arg13: memref<128x128xbf16, #tpu.memory_space<vmem>>, %arg14: memref<1x128xf32, #tpu.memory_space<vmem>>, %arg15: memref<1x32x128xf32, #tpu.memory_space<vmem>>) attributes {dimension_semantics = [#tpu.dimension_semantics<parallel>], iteration_bounds = array<i64: 4>, scalar_prefetch = 0 : i64, scratch_operands = 0 : i64, tpu.core_type = #tpu.core_type<tc>, window_params = [{transform_indices = @transform_0, window_bounds = array<i64: 1, 32, 256>}, {transform_indices = @transform_1, window_bounds = array<i64: 1, 256, 256>}, {transform_indices = @transform_2, window_bounds = array<i64: 1, 1, 256>}, {pipeline_mode = #tpu.pipeline_mode<synchronous>, transform_indices = @transform_3, window_bounds = array<i64: 2, 32, 32>}, {pipeline_mode = #tpu.pipeline_mode<synchronous>, transform_indices = @transform_4, window_bounds = array<i64: 2, 32, 1>}, {transform_indices = @transform_5, window_bounds = array<i64: 1, 32, 256>}, {transform_indices = @transform_6, window_bounds = array<i64: 1, 32, 1>}, {transform_indices = @transform_7, window_bounds = array<i64: 1, 32, 2>}, {pipeline_mode = #tpu.pipeline_mode<synchronous>, transform_indices = @transform_8, window_bounds = array<i64: 2, 128>}, {pipeline_mode = #tpu.pipeline_mode<synchronous>, transform_indices = @transform_9, window_bounds = array<i64: 32, 128>}, {pipeline_mode = #tpu.pipeline_mode<synchronous>, transform_indices = @transform_10, window_bounds = array<i64: 1, 128, 128>}, {pipeline_mode = #tpu.pipeline_mode<synchronous>, transform_indices = @transform_11, window_bounds = array<i64: 2, 1, 128>}, {pipeline_mode = #tpu.pipeline_mode<synchronous>, transform_indices = @transform_12, window_bounds = array<i64: 128, 128>}, {pipeline_mode = #tpu.pipeline_mode<synchronous>, transform_indices = @transform_13, window_bounds = array<i64: 1, 128>}, {transform_indices = @transform_14, window_bounds = array<i64: 1, 32, 128>}]} {
    %c0 = arith.constant 0 : index
    %c0_0 = arith.constant 0 : index
    %c0_1 = arith.constant 0 : index
    %0 = vector.load %arg1[%c0, %c0_0, %c0_1] : memref<1x32x256xf32, #tpu.memory_space<vmem>>, vector<1x32x256xf32>
    %1 = vector.shape_cast %0 : vector<1x32x256xf32> to vector<32x256xf32>
    %c0_2 = arith.constant 0 : index
    %c0_3 = arith.constant 0 : index
    %c0_4 = arith.constant 0 : index
    %2 = vector.load %arg2[%c0_2, %c0_3, %c0_4] : memref<1x256x256xbf16, #tpu.memory_space<vmem>>, vector<1x256x256xbf16>
    %3 = vector.shape_cast %2 : vector<1x256x256xbf16> to vector<256x256xbf16>
    %c0_5 = arith.constant 0 : index
    %c0_6 = arith.constant 0 : index
    %c0_7 = arith.constant 0 : index
    %4 = vector.load %arg3[%c0_5, %c0_6, %c0_7] : memref<1x1x256xf32, #tpu.memory_space<vmem>>, vector<1x1x256xf32>
    %5 = vector.shape_cast %4 : vector<1x1x256xf32> to vector<1x256xf32>
    %c0_8 = arith.constant 0 : index
    %c0_9 = arith.constant 0 : index
    %c0_10 = arith.constant 0 : index
    %6 = vector.load %arg4[%c0_8, %c0_9, %c0_10] : memref<2x32x32xbf16, #tpu.memory_space<vmem>>, vector<1x32x32xbf16>
    %7 = vector.shape_cast %6 : vector<1x32x32xbf16> to vector<32x32xbf16>
    %8 = arith.truncf %1 : vector<32x256xf32> to vector<32x256xbf16>
    %cst = arith.constant dense<0.000000e+00> : vector<32x256xf32>
    %9 = tpu.matmul %7, %8, %cst {dimension_numbers = #tpu.dot_dimension_numbers<[1], [0], [0], [1], [0, 0, 1, 1], [], []>} : vector<32x32xbf16>, vector<32x256xbf16>, vector<32x256xf32> -> vector<32x256xf32>
    %c0_11 = arith.constant 0 : index
    %c0_12 = arith.constant 0 : index
    %c0_13 = arith.constant 0 : index
    %10 = vector.load %arg5[%c0_11, %c0_12, %c0_13] : memref<2x32x1xf32, #tpu.memory_space<vmem>>, vector<1x32x1xf32>
    %11 = vector.shape_cast %10 : vector<1x32x1xf32> to vector<32x1xf32>
    %12 = vector.broadcast %11 : vector<32x1xf32> to vector<32x256xf32>
    %13 = arith.addf %9, %12 : vector<32x256xf32>
    %cst_14 = arith.constant 0.000000e+00 : f32
    %14 = vector.broadcast %cst_14 : f32 to vector<32x256xf32>
    %15 = arith.maximumf %13, %14 : vector<32x256xf32>
    %16 = arith.truncf %15 : vector<32x256xf32> to vector<32x256xbf16>
    %cst_15 = arith.constant dense<0.000000e+00> : vector<32x256xf32>
    %17 = tpu.matmul %16, %3, %cst_15 {dimension_numbers = #tpu.dot_dimension_numbers<[1], [0], [0], [1], [0, 0, 1, 1], [], []>} : vector<32x256xbf16>, vector<256x256xbf16>, vector<32x256xf32> -> vector<32x256xf32>
    %18 = vector.broadcast %5 : vector<1x256xf32> to vector<32x256xf32>
    %19 = arith.mulf %17, %18 : vector<32x256xf32>
    %20 = arith.addf %1, %19 : vector<32x256xf32>
    %c1 = arith.constant 1 : index
    %c0_16 = arith.constant 0 : index
    %c0_17 = arith.constant 0 : index
    %21 = vector.load %arg4[%c1, %c0_16, %c0_17] : memref<2x32x32xbf16, #tpu.memory_space<vmem>>, vector<1x32x32xbf16>
    %22 = vector.shape_cast %21 : vector<1x32x32xbf16> to vector<32x32xbf16>
    %23 = arith.truncf %20 : vector<32x256xf32> to vector<32x256xbf16>
    %cst_18 = arith.constant dense<0.000000e+00> : vector<32x256xf32>
    %24 = tpu.matmul %22, %23, %cst_18 {dimension_numbers = #tpu.dot_dimension_numbers<[1], [0], [0], [1], [0, 0, 1, 1], [], []>} : vector<32x32xbf16>, vector<32x256xbf16>, vector<32x256xf32> -> vector<32x256xf32>
    %c1_19 = arith.constant 1 : index
    %c0_20 = arith.constant 0 : index
    %c0_21 = arith.constant 0 : index
    %25 = vector.load %arg5[%c1_19, %c0_20, %c0_21] : memref<2x32x1xf32, #tpu.memory_space<vmem>>, vector<1x32x1xf32>
    %26 = vector.shape_cast %25 : vector<1x32x1xf32> to vector<32x1xf32>
    %27 = vector.broadcast %26 : vector<32x1xf32> to vector<32x256xf32>
    %28 = arith.addf %24, %27 : vector<32x256xf32>
    %cst_22 = arith.constant 0.000000e+00 : f32
    %29 = vector.broadcast %cst_22 : f32 to vector<32x256xf32>
    %30 = arith.maximumf %28, %29 : vector<32x256xf32>
    %31 = arith.truncf %30 : vector<32x256xf32> to vector<32x256xbf16>
    %cst_23 = arith.constant dense<0.000000e+00> : vector<32x256xf32>
    %32 = tpu.matmul %31, %3, %cst_23 {dimension_numbers = #tpu.dot_dimension_numbers<[1], [0], [0], [1], [0, 0, 1, 1], [], []>} : vector<32x256xbf16>, vector<256x256xbf16>, vector<32x256xf32> -> vector<32x256xf32>
    %33 = vector.broadcast %5 : vector<1x256xf32> to vector<32x256xf32>
    %34 = arith.mulf %32, %33 : vector<32x256xf32>
    %35 = arith.addf %20, %34 : vector<32x256xf32>
    %c0_24 = arith.constant 0 : index
    %c0_25 = arith.constant 0 : index
    %c0_26 = arith.constant 0 : index
    %36 = vector.load %arg6[%c0_24, %c0_25, %c0_26] : memref<1x32x256xbf16, #tpu.memory_space<vmem>>, vector<1x32x256xbf16>
    %37 = vector.shape_cast %36 : vector<1x32x256xbf16> to vector<32x256xbf16>
    %38 = arith.truncf %35 : vector<32x256xf32> to vector<32x256xbf16>
    %cst_27 = arith.constant dense<0.000000e+00> : vector<32x32xf32>
    %39 = tpu.matmul %37, %38, %cst_27 {dimension_numbers = #tpu.dot_dimension_numbers<[1], [1], [0], [0], [0, 0, 1, 0], [], []>} : vector<32x256xbf16>, vector<32x256xbf16>, vector<32x32xf32> -> vector<32x32xf32>
    %c0_28 = arith.constant 0 : index
    %c0_29 = arith.constant 0 : index
    %c0_30 = arith.constant 0 : index
    %40 = vector.load %arg7[%c0_28, %c0_29, %c0_30] : memref<1x32x1xf32, #tpu.memory_space<vmem>>, vector<1x32x1xf32>
    %41 = vector.shape_cast %40 : vector<1x32x1xf32> to vector<32x1xf32>
    %42 = vector.broadcast %41 : vector<32x1xf32> to vector<32x32xf32>
    %43 = arith.mulf %39, %42 : vector<32x32xf32>
    %c0_31 = arith.constant 0 : index
    %c0_32 = arith.constant 0 : index
    %c0_33 = arith.constant 0 : index
    %44 = vector.load %arg8[%c0_31, %c0_32, %c0_33] : memref<1x32x2xf32, #tpu.memory_space<vmem>>, vector<1x32x2xf32>
    %45 = vector.shape_cast %44 : vector<1x32x2xf32> to vector<32x2xf32>
    %46 = vector.extract_strided_slice %45 {offsets = [0, 0], sizes = [32, 1], strides = [1, 1]} : vector<32x2xf32> to vector<32x1xf32>
    %c0_34 = arith.constant 0 : index
    %c0_35 = arith.constant 0 : index
    %47 = vector.load %arg9[%c0_34, %c0_35] : memref<2x128xf32, #tpu.memory_space<vmem>>, vector<1x128xf32>
    %48 = vector.broadcast %46 : vector<32x1xf32> to vector<32x128xf32>
    %49 = vector.broadcast %47 : vector<1x128xf32> to vector<32x128xf32>
    %50 = arith.mulf %48, %49 : vector<32x128xf32>
    %51 = vector.extract_strided_slice %45 {offsets = [0, 1], sizes = [32, 1], strides = [1, 1]} : vector<32x2xf32> to vector<32x1xf32>
    %c1_36 = arith.constant 1 : index
    %c0_37 = arith.constant 0 : index
    %52 = vector.load %arg9[%c1_36, %c0_37] : memref<2x128xf32, #tpu.memory_space<vmem>>, vector<1x128xf32>
    %53 = vector.broadcast %51 : vector<32x1xf32> to vector<32x128xf32>
    %54 = vector.broadcast %52 : vector<1x128xf32> to vector<32x128xf32>
    %55 = arith.mulf %53, %54 : vector<32x128xf32>
    %56 = arith.addf %50, %55 : vector<32x128xf32>
    %57 = arith.truncf %43 : vector<32x32xf32> to vector<32x32xbf16>
    %c0_38 = arith.constant 0 : index
    %c0_39 = arith.constant 0 : index
    %58 = vector.load %arg10[%c0_38, %c0_39] : memref<32x128xbf16, #tpu.memory_space<vmem>>, vector<32x128xbf16>
    %cst_40 = arith.constant dense<0.000000e+00> : vector<32x128xf32>
    %59 = tpu.matmul %57, %58, %cst_40 {dimension_numbers = #tpu.dot_dimension_numbers<[1], [0], [0], [1], [0, 0, 1, 1], [], []>} : vector<32x32xbf16>, vector<32x128xbf16>, vector<32x128xf32> -> vector<32x128xf32>
    %60 = arith.addf %56, %59 : vector<32x128xf32>
    %c0_41 = arith.constant 0 : index
    %c0_42 = arith.constant 0 : index
    %c0_43 = arith.constant 0 : index
    %61 = vector.load %arg12[%c0_41, %c0_42, %c0_43] : memref<2x1x128xf32, #tpu.memory_space<vmem>>, vector<1x1x128xf32>
    %62 = vector.shape_cast %61 : vector<1x1x128xf32> to vector<1x128xf32>
    %63 = vector.broadcast %62 : vector<1x128xf32> to vector<32x128xf32>
    %64 = arith.addf %60, %63 : vector<32x128xf32>
    %cst_44 = arith.constant 0.000000e+00 : f32
    %65 = vector.broadcast %cst_44 : f32 to vector<32x128xf32>
    %66 = arith.maximumf %64, %65 : vector<32x128xf32>
    %67 = arith.truncf %66 : vector<32x128xf32> to vector<32x128xbf16>
    %c0_45 = arith.constant 0 : index
    %c0_46 = arith.constant 0 : index
    %c0_47 = arith.constant 0 : index
    %68 = vector.load %arg11[%c0_45, %c0_46, %c0_47] : memref<1x128x128xbf16, #tpu.memory_space<vmem>>, vector<1x128x128xbf16>
    %69 = vector.shape_cast %68 : vector<1x128x128xbf16> to vector<128x128xbf16>
    %cst_48 = arith.constant dense<0.000000e+00> : vector<32x128xf32>
    %70 = tpu.matmul %67, %69, %cst_48 {dimension_numbers = #tpu.dot_dimension_numbers<[1], [0], [0], [1], [0, 0, 1, 1], [], []>} : vector<32x128xbf16>, vector<128x128xbf16>, vector<32x128xf32> -> vector<32x128xf32>
    %c1_49 = arith.constant 1 : index
    %c0_50 = arith.constant 0 : index
    %c0_51 = arith.constant 0 : index
    %71 = vector.load %arg12[%c1_49, %c0_50, %c0_51] : memref<2x1x128xf32, #tpu.memory_space<vmem>>, vector<1x1x128xf32>
    %72 = vector.shape_cast %71 : vector<1x1x128xf32> to vector<1x128xf32>
    %73 = vector.broadcast %72 : vector<1x128xf32> to vector<32x128xf32>
    %74 = arith.addf %70, %73 : vector<32x128xf32>
    %cst_52 = arith.constant 0.000000e+00 : f32
    %75 = vector.broadcast %cst_52 : f32 to vector<32x128xf32>
    %76 = arith.maximumf %74, %75 : vector<32x128xf32>
    %77 = arith.truncf %76 : vector<32x128xf32> to vector<32x128xbf16>
    %c0_53 = arith.constant 0 : index
    %c0_54 = arith.constant 0 : index
    %78 = vector.load %arg13[%c0_53, %c0_54] : memref<128x128xbf16, #tpu.memory_space<vmem>>, vector<128x128xbf16>
    %cst_55 = arith.constant dense<0.000000e+00> : vector<32x128xf32>
    %79 = tpu.matmul %77, %78, %cst_55 {dimension_numbers = #tpu.dot_dimension_numbers<[1], [0], [0], [1], [0, 0, 1, 1], [], []>} : vector<32x128xbf16>, vector<128x128xbf16>, vector<32x128xf32> -> vector<32x128xf32>
    %c0_56 = arith.constant 0 : index
    %c0_57 = arith.constant 0 : index
    %80 = vector.load %arg14[%c0_56, %c0_57] : memref<1x128xf32, #tpu.memory_space<vmem>>, vector<1x128xf32>
    %81 = vector.broadcast %80 : vector<1x128xf32> to vector<32x128xf32>
    %82 = arith.addf %79, %81 : vector<32x128xf32>
    %c0_58 = arith.constant 0 : index
    %c0_59 = arith.constant 0 : index
    %c0_60 = arith.constant 0 : index
    %83 = vector.load %arg15[%c0_58, %c0_59, %c0_60] : memref<1x32x128xf32, #tpu.memory_space<vmem>>, vector<1x32x128xf32>
    %84 = vector.shape_cast %83 : vector<1x32x128xf32> to vector<32x128xf32>
    %85 = vector.shape_cast %82 : vector<32x128xf32> to vector<1x32x128xf32>
    tpu.vector_store %arg15[%c0_58, %c0_59, %c0_60], %85 {strides = array<i32>} : memref<1x32x128xf32, #tpu.memory_space<vmem>>, vector<1x32x128xf32>,
    return
  }
  func.func @transform_0(%arg0: i32) -> (i32, i32, i32) {
    %c0_i32 = arith.constant 0 : i32
    %c0_i32_0 = arith.constant 0 : i32
    %c0_i32_1 = arith.constant 0 : i32
    return %arg0, %c0_i32, %c0_i32_0 : i32, i32, i32
  }
  func.func @transform_1(%arg0: i32) -> (i32, i32, i32) {
    %c0_i32 = arith.constant 0 : i32
    %c0_i32_0 = arith.constant 0 : i32
    %c0_i32_1 = arith.constant 0 : i32
    return %arg0, %c0_i32, %c0_i32_0 : i32, i32, i32
  }
  func.func @transform_2(%arg0: i32) -> (i32, i32, i32) {
    %c0_i32 = arith.constant 0 : i32
    %c0_i32_0 = arith.constant 0 : i32
    %c0_i32_1 = arith.constant 0 : i32
    return %arg0, %c0_i32, %c0_i32_0 : i32, i32, i32
  }
  func.func @transform_3(%arg0: i32) -> (i32, i32, i32) {
    %c0_i32 = arith.constant 0 : i32
    %c0_i32_0 = arith.constant 0 : i32
    %c0_i32_1 = arith.constant 0 : i32
    %c0_i32_2 = arith.constant 0 : i32
    return %c0_i32, %c0_i32_0, %c0_i32_1 : i32, i32, i32
  }
  func.func @transform_4(%arg0: i32) -> (i32, i32, i32) {
    %c0_i32 = arith.constant 0 : i32
    %c0_i32_0 = arith.constant 0 : i32
    %c0_i32_1 = arith.constant 0 : i32
    %c0_i32_2 = arith.constant 0 : i32
    return %c0_i32, %c0_i32_0, %c0_i32_1 : i32, i32, i32
  }
  func.func @transform_5(%arg0: i32) -> (i32, i32, i32) {
    %c0_i32 = arith.constant 0 : i32
    %c0_i32_0 = arith.constant 0 : i32
    %c0_i32_1 = arith.constant 0 : i32
    return %arg0, %c0_i32, %c0_i32_0 : i32, i32, i32
  }
  func.func @transform_6(%arg0: i32) -> (i32, i32, i32) {
    %c0_i32 = arith.constant 0 : i32
    %c0_i32_0 = arith.constant 0 : i32
    %c0_i32_1 = arith.constant 0 : i32
    return %arg0, %c0_i32, %c0_i32_0 : i32, i32, i32
  }
  func.func @transform_7(%arg0: i32) -> (i32, i32, i32) {
    %c0_i32 = arith.constant 0 : i32
    %c0_i32_0 = arith.constant 0 : i32
    %c0_i32_1 = arith.constant 0 : i32
    return %arg0, %c0_i32, %c0_i32_0 : i32, i32, i32
  }
  func.func @transform_8(%arg0: i32) -> (i32, i32) {
    %c0_i32 = arith.constant 0 : i32
    %c0_i32_0 = arith.constant 0 : i32
    %c0_i32_1 = arith.constant 0 : i32
    return %c0_i32, %c0_i32_0 : i32, i32
  }
  func.func @transform_9(%arg0: i32) -> (i32, i32) {
    %c0_i32 = arith.constant 0 : i32
    %c0_i32_0 = arith.constant 0 : i32
    %c0_i32_1 = arith.constant 0 : i32
    return %c0_i32, %c0_i32_0 : i32, i32
  }
  func.func @transform_10(%arg0: i32) -> (i32, i32, i32) {
    %c0_i32 = arith.constant 0 : i32
    %c0_i32_0 = arith.constant 0 : i32
    %c0_i32_1 = arith.constant 0 : i32
    %c0_i32_2 = arith.constant 0 : i32
    return %c0_i32, %c0_i32_0, %c0_i32_1 : i32, i32, i32
  }
  func.func @transform_11(%arg0: i32) -> (i32, i32, i32) {
    %c0_i32 = arith.constant 0 : i32
    %c0_i32_0 = arith.constant 0 : i32
    %c0_i32_1 = arith.constant 0 : i32
    %c0_i32_2 = arith.constant 0 : i32
    return %c0_i32, %c0_i32_0, %c0_i32_1 : i32, i32, i32
  }
  func.func @transform_12(%arg0: i32) -> (i32, i32) {
    %c0_i32 = arith.constant 0 : i32
    %c0_i32_0 = arith.constant 0 : i32
    %c0_i32_1 = arith.constant 0 : i32
    return %c0_i32, %c0_i32_0 : i32, i32
  }
  func.func @transform_13(%arg0: i32) -> (i32, i32) {
    %c0_i32 = arith.constant 0 : i32
    %c0_i32_0 = arith.constant 0 : i32
    %c0_i32_1 = arith.constant 0 : i32
    return %c0_i32, %c0_i32_0 : i32, i32
  }
  func.func @transform_14(%arg0: i32) -> (i32, i32, i32) {
    %c0_i32 = arith.constant 0 : i32
    %c0_i32_0 = arith.constant 0 : i32
    %c0_i32_1 = arith.constant 0 : i32
    return %arg0, %c0_i32, %c0_i32_0 : i32, i32, i32
  }
}

</mosaic_0001>

<llo_original>
// kernel: tpu_custom_call.1
$region0: #{tpu_custom_call.1}
  #allocation0 [shape = 'u32[]', space=smem, size = 0x4, offset = 0x4, fixed_abs, tag = 'smem constant byte address 0x4 - core index']
  #allocation1 [shape = 'u32[72,128]{1,0:T(1,128)}', space=vmem, size = 0x9000, scoped, tag = 'internal scratch']
  %s0 = inlined_call_operand.vmem [shape: f32[4,32,256], index: 0, kind: input, shape index: {}]
  %s1 = inlined_call_operand.hbm [shape: bf16[4,256,256], index: 1, kind: input, shape index: {}]
  %s2 = inlined_call_operand.hbm [shape: f32[4,1,256], index: 2, kind: input, shape index: {}]
  %s3 = inlined_call_operand.hbm [shape: bf16[2,32,32], index: 3, kind: input, shape index: {}]
  %s4 = inlined_call_operand.vmem [shape: f32[2,32,1], index: 4, kind: input, shape index: {}]
  %s5 = inlined_call_operand.hbm [shape: bf16[4,32,256], index: 5, kind: input, shape index: {}]
  %s6 = inlined_call_operand.vmem [shape: f32[4,32,1], index: 6, kind: input, shape index: {}]
  %s7 = inlined_call_operand.vmem [shape: f32[4,32,2], index: 7, kind: input, shape index: {}]
  %s8 = inlined_call_operand.vmem [shape: f32[2,128], index: 8, kind: input, shape index: {}]
  %s9 = inlined_call_operand.vmem [shape: bf16[32,128], index: 9, kind: input, shape index: {}]
  %s10 = inlined_call_operand.vmem [shape: bf16[1,128,128], index: 10, kind: input, shape index: {}]
  %s11 = inlined_call_operand.vmem [shape: f32[2,1,128], index: 11, kind: input, shape index: {}]
  %s12 = inlined_call_operand.hbm [shape: bf16[128,128], index: 12, kind: input, shape index: {}]
  %s13 = inlined_call_operand.vmem [shape: f32[1,128], index: 13, kind: input, shape index: {}]
  %s14 = inlined_call_operand.hbm [shape: f32[4,32,128], index: 14, kind: output, shape index: {}]
  %s15 = sld [smem:[#allocation0]]
  $region109: #{tpu_custom_call.1} parent=0
    _
  %s17 = ssub.s32 1, %s15
  %s18 = scalar_select 0, %s17, %s15
  $region1: #{tpu_custom_call.1} parent=0
    #allocation2 [shape = 'u8[262144]{0}', space=vmem, size = 0x40000, scoped, tag = 'input window, operand 1']
    #allocation3 [shape = 's32[2]{0}', space=sflag, size = 0x8, scoped, tag = 'scoped memory for tpu_custom_call.1']
    #allocation4 [shape = 's32[2]{0}', space=sflag, size = 0x8, scoped, tag = 'scoped memory for tpu_custom_call.1']
    #allocation5 [shape = 'u8[2048]{0}', space=vmem, size = 0x800, scoped, tag = 'input window, operand 2']
    #allocation6 [shape = 's32[2]{0}', space=sflag, size = 0x8, scoped, tag = 'scoped memory for tpu_custom_call.1']
    #allocation7 [shape = 'u8[16384]{0}', space=vmem, size = 0x4000, scoped, tag = 'input window, operand 3, single buffered']
    #allocation8 [shape = 'u8[32768]{0}', space=vmem, size = 0x8000, scoped, tag = 'input window, operand 5']
    #allocation9 [shape = 's32[2]{0}', space=sflag, size = 0x8, scoped, tag = 'scoped memory for tpu_custom_call.1']
    #allocation10 [shape = 'u8[32768]{0}', space=vmem, size = 0x8000, scoped, tag = 'input window, operand 12, single buffered']
    #allocation11 [shape = 'u8[32768]{0}', space=vmem, size = 0x8000, scoped, tag = 'output window, operand 0']
    %19 = vsyncpa [#allocation3], 0
    %s20 = scalar_lea.sflag [#allocation3], 1
    %21 = vsyncpa %s20, 0
    %22 = vsyncpa [#allocation6], 0
    %s23 = scalar_lea.sflag [#allocation6], 1
    %24 = vsyncpa %s23, 0
    %25 = vsyncpa [#allocation9], 0
    %s26 = scalar_lea.sflag [#allocation9], 1
    %27 = vsyncpa %s26, 0
    %28 = vsyncpa [#allocation4], 0
    %s29 = scalar_lea.sflag [#allocation4], 1
    %30 = vsyncpa %s29, 0
    loop: start=0, step=1, limit=6
    $region2: #{tpu_custom_call.1} parent=1 // loop_pre_header
      _
    $region3: #{tpu_custom_call.1} parent=1 // loop_header
      %s32 = sphi 0, %s36
      %p33 = scmp.ge.s32.totalorder %s32, 6
      %s42 = sphi 0, %s44
      %s45 = sphi 0, %s42
      %s46 = sphi 0, %s45
      %s62 = sphi 0, %s46
      %s68 = sphi 0, %s70
      %s71 = sphi 0, %s68
      %s72 = sphi 0, %s71
      %s88 = sphi 0, %s72
      %s94 = sphi 0, %s96
      %s97 = sphi 0, %s94
      %s98 = sphi 0, %s97
      %s114 = sphi 0, %s98
      %s118 = sphi 0, %s118
      %s120 = sphi 0, %s118
      %s121 = sphi 0, %s120
      %s135 = sphi 0, %s121
      %s139 = sphi 0, %s139
      %s141 = sphi 0, %s139
      %s142 = sphi 0, %s141
      %s156 = sphi 0, %s142
      %s162 = sphi 0, %s164
      %s165 = sphi 0, %s162
      %s166 = sphi 0, %s165
      %s182 = sphi 0, %s166
      %s188 = sphi 0, %s190
      %s191 = sphi 0, %s188
      %s192 = sphi 0, %s191
      %s208 = sphi 0, %s192
      %s214 = sphi 0, %s216
      %s217 = sphi 0, %s214
      %s218 = sphi 0, %s217
      %s234 = sphi 0, %s218
      %s238 = sphi 0, %s238
      %s240 = sphi 0, %s238
      %s241 = sphi 0, %s240
      %s255 = sphi 0, %s241
      %s259 = sphi 0, %s259
      %s261 = sphi 0, %s259
      %s262 = sphi 0, %s261
      %s276 = sphi 0, %s262
      %s280 = sphi 0, %s280
      %s282 = sphi 0, %s280
      %s283 = sphi 0, %s282
      %s297 = sphi 0, %s283
      %s301 = sphi 0, %s301
      %s303 = sphi 0, %s301
      %s304 = sphi 0, %s303
      %s318 = sphi 0, %s304
      %s322 = sphi 0, %s322
      %s324 = sphi 0, %s322
      %s325 = sphi 0, %s324
      %s339 = sphi 0, %s325
      %s343 = sphi 0, %s343
      %s345 = sphi 0, %s343
      %s346 = sphi 0, %s345
      %s360 = sphi 0, %s346
      %s366 = sphi 0, %s368
      %s369 = sphi 0, %s366
      %s370 = sphi 0, %s369
      %s386 = sphi 0, %s370
    $region4: #{tpu_custom_call.1} parent=1 // loop_header_branch
      %35 = sbr.rel (%p33) target = $region8
    $region5: #{tpu_custom_call.1} parent=1 // loop_body
      %s37 = ssub.s32 %s32, 1
      %s38 = ssub.s32 %s32, 2
      %s39 = sadd.s32 %s32, 1
      %s40 = ssub.s32 %s32, %s39
      %p41 = scmp.eq.s32.totalorder %s40, 0
      %s43 = sadd.s32 %s42, 1
      %s44 = scalar_select %p41, %s42, %s43
      %p47 = pneg %p41
      %p48 = scmp.eq.s32.totalorder %s32, 3
      %p49 = por %p47, %p48
      %p50 = scmp.ne.s32.totalorder %s42, %s45
      %p51 = scmp.eq.s32.totalorder %s32, 0
      %p52 = por %p50, %p51
      %p53 = scmp.ne.s32.totalorder %s42, %s45
      %p54 = scmp.eq.s32.totalorder %s37, 3
      %p55 = por %p53, %p54
      %p56 = scmp.ne.s32.totalorder %s45, %s46
      %p57 = scmp.eq.s32.totalorder %s37, 0
      %p58 = por %p56, %p57
      %p59 = scmp.ne.s32.totalorder %s45, %s46
      %p60 = scmp.eq.s32.totalorder %s38, 3
      %p61 = por %p59, %p60
      %p63 = scmp.ne.s32.totalorder %s46, %s62
      %p64 = scmp.eq.s32.totalorder %s38, 0
      %p65 = por %p63, %p64
      %s66 = ssub.s32 %s32, %s39
      %p67 = scmp.eq.s32.totalorder %s66, 0
      %s69 = sadd.s32 %s68, 1
      %s70 = scalar_select %p67, %s68, %s69
      %p73 = pneg %p67
      %p74 = scmp.eq.s32.totalorder %s32, 3
      %p75 = por %p73, %p74
      %p76 = scmp.ne.s32.totalorder %s68, %s71
      %p77 = scmp.eq.s32.totalorder %s32, 0
      %p78 = por %p76, %p77
      %p79 = scmp.ne.s32.totalorder %s68, %s71
      %p80 = scmp.eq.s32.totalorder %s37, 3
      %p81 = por %p79, %p80
      %p82 = scmp.ne.s32.totalorder %s71, %s72
      %p83 = scmp.eq.s32.totalorder %s37, 0
      %p84 = por %p82, %p83
      %p85 = scmp.ne.s32.totalorder %s71, %s72
      %p86 = scmp.eq.s32.totalorder %s38, 3
      %p87 = por %p85, %p86
      %p89 = scmp.ne.s32.totalorder %s72, %s88
      %p90 = scmp.eq.s32.totalorder %s38, 0
      %p91 = por %p89, %p90
      %s92 = ssub.s32 %s32, %s39
      %p93 = scmp.eq.s32.totalorder %s92, 0
      %s95 = sadd.s32 %s94, 1
      %s96 = scalar_select %p93, %s94, %s95
      %p99 = pneg %p93
      %p100 = scmp.eq.s32.totalorder %s32, 3
      %p101 = por %p99, %p100
      %p102 = scmp.ne.s32.totalorder %s94, %s97
      %p103 = scmp.eq.s32.totalorder %s32, 0
      %p104 = por %p102, %p103
      %p105 = scmp.ne.s32.totalorder %s94, %s97
      %p106 = scmp.eq.s32.totalorder %s37, 3
      %p107 = por %p105, %p106
      %p108 = scmp.ne.s32.totalorder %s97, %s98
      %p109 = scmp.eq.s32.totalorder %s37, 0
      %p110 = por %p108, %p109
      %p111 = scmp.ne.s32.totalorder %s97, %s98
      %p112 = scmp.eq.s32.totalorder %s38, 3
      %p113 = por %p111, %p112
      %p115 = scmp.ne.s32.totalorder %s98, %s114
      %p116 = scmp.eq.s32.totalorder %s38, 0
      %p117 = por %p115, %p116
      %s119 = sadd.s32 %s118, 1
      %p122 = scmp.eq.s32.totalorder %s32, 3
      %p123 = scmp.ne.s32.totalorder %s118, %s120
      %p124 = scmp.eq.s32.totalorder %s32, 0
      %p125 = por %p123, %p124
      %p126 = scmp.ne.s32.totalorder %s118, %s120
      %p127 = scmp.eq.s32.totalorder %s37, 3
      %p128 = por %p126, %p127
      %p129 = scmp.ne.s32.totalorder %s120, %s121
      %p130 = scmp.eq.s32.totalorder %s37, 0
      %p131 = por %p129, %p130
      %p132 = scmp.ne.s32.totalorder %s120, %s121
      %p133 = scmp.eq.s32.totalorder %s38, 3
      %p134 = por %p132, %p133
      %p136 = scmp.ne.s32.totalorder %s121, %s135
      %p137 = scmp.eq.s32.totalorder %s38, 0
      %p138 = por %p136, %p137
      %s140 = sadd.s32 %s139, 1
      %p143 = scmp.eq.s32.totalorder %s32, 3
      %p144 = scmp.ne.s32.totalorder %s139, %s141
      %p145 = scmp.eq.s32.totalorder %s32, 0
      %p146 = por %p144, %p145
      %p147 = scmp.ne.s32.totalorder %s139, %s141
      %p148 = scmp.eq.s32.totalorder %s37, 3
      %p149 = por %p147, %p148
      %p150 = scmp.ne.s32.totalorder %s141, %s142
      %p151 = scmp.eq.s32.totalorder %s37, 0
      %p152 = por %p150, %p151
      %p153 = scmp.ne.s32.totalorder %s141, %s142
      %p154 = scmp.eq.s32.totalorder %s38, 3
      %p155 = por %p153, %p154
      %p157 = scmp.ne.s32.totalorder %s142, %s156
      %p158 = scmp.eq.s32.totalorder %s38, 0
      %p159 = por %p157, %p158
      %s160 = ssub.s32 %s32, %s39
      %p161 = scmp.eq.s32.totalorder %s160, 0
      %s163 = sadd.s32 %s162, 1
      %s164 = scalar_select %p161, %s162, %s163
      %p167 = pneg %p161
      %p168 = scmp.eq.s32.totalorder %s32, 3
      %p169 = por %p167, %p168
      %p170 = scmp.ne.s32.totalorder %s162, %s165
      %p171 = scmp.eq.s32.totalorder %s32, 0
      %p172 = por %p170, %p171
      %p173 = scmp.ne.s32.totalorder %s162, %s165
      %p174 = scmp.eq.s32.totalorder %s37, 3
      %p175 = por %p173, %p174
      %p176 = scmp.ne.s32.totalorder %s165, %s166
      %p177 = scmp.eq.s32.totalorder %s37, 0
      %p178 = por %p176, %p177
      %p179 = scmp.ne.s32.totalorder %s165, %s166
      %p180 = scmp.eq.s32.totalorder %s38, 3
      %p181 = por %p179, %p180
      %p183 = scmp.ne.s32.totalorder %s166, %s182
      %p184 = scmp.eq.s32.totalorder %s38, 0
      %p185 = por %p183, %p184
      %s186 = ssub.s32 %s32, %s39
      %p187 = scmp.eq.s32.totalorder %s186, 0
      %s189 = sadd.s32 %s188, 1
      %s190 = scalar_select %p187, %s188, %s189
      %p193 = pneg %p187
      %p194 = scmp.eq.s32.totalorder %s32, 3
      %p195 = por %p193, %p194
      %p196 = scmp.ne.s32.totalorder %s188, %s191
      %p197 = scmp.eq.s32.totalorder %s32, 0
      %p198 = por %p196, %p197
      %p199 = scmp.ne.s32.totalorder %s188, %s191
      %p200 = scmp.eq.s32.totalorder %s37, 3
      %p201 = por %p199, %p200
      %p202 = scmp.ne.s32.totalorder %s191, %s192
      %p203 = scmp.eq.s32.totalorder %s37, 0
      %p204 = por %p202, %p203
      %p205 = scmp.ne.s32.totalorder %s191, %s192
      %p206 = scmp.eq.s32.totalorder %s38, 3
      %p207 = por %p205, %p206
      %p209 = scmp.ne.s32.totalorder %s192, %s208
      %p210 = scmp.eq.s32.totalorder %s38, 0
      %p211 = por %p209, %p210
      %s212 = ssub.s32 %s32, %s39
      %p213 = scmp.eq.s32.totalorder %s212, 0
      %s215 = sadd.s32 %s214, 1
      %s216 = scalar_select %p213, %s214, %s215
      %p219 = pneg %p213
      %p220 = scmp.eq.s32.totalorder %s32, 3
      %p221 = por %p219, %p220
      %p222 = scmp.ne.s32.totalorder %s214, %s217
      %p223 = scmp.eq.s32.totalorder %s32, 0
      %p224 = por %p222, %p223
      %p225 = scmp.ne.s32.totalorder %s214, %s217
      %p226 = scmp.eq.s32.totalorder %s37, 3
      %p227 = por %p225, %p226
      %p228 = scmp.ne.s32.totalorder %s217, %s218
      %p229 = scmp.eq.s32.totalorder %s37, 0
      %p230 = por %p228, %p229
      %p231 = scmp.ne.s32.totalorder %s217, %s218
      %p232 = scmp.eq.s32.totalorder %s38, 3
      %p233 = por %p231, %p232
      %p235 = scmp.ne.s32.totalorder %s218, %s234
      %p236 = scmp.eq.s32.totalorder %s38, 0
      %p237 = por %p235, %p236
      %s239 = sadd.s32 %s238, 1
      %p242 = scmp.eq.s32.totalorder %s32, 3
      %p243 = scmp.ne.s32.totalorder %s238, %s240
      %p244 = scmp.eq.s32.totalorder %s32, 0
      %p245 = por %p243, %p244
      %p246 = scmp.ne.s32.totalorder %s238, %s240
      %p247 = scmp.eq.s32.totalorder %s37, 3
      %p248 = por %p246, %p247
      %p249 = scmp.ne.s32.totalorder %s240, %s241
      %p250 = scmp.eq.s32.totalorder %s37, 0
      %p251 = por %p249, %p250
      %p252 = scmp.ne.s32.totalorder %s240, %s241
      %p253 = scmp.eq.s32.totalorder %s38, 3
      %p254 = por %p252, %p253
      %p256 = scmp.ne.s32.totalorder %s241, %s255
      %p257 = scmp.eq.s32.totalorder %s38, 0
      %p258 = por %p256, %p257
      %s260 = sadd.s32 %s259, 1
      %p263 = scmp.eq.s32.totalorder %s32, 3
      %p264 = scmp.ne.s32.totalorder %s259, %s261
      %p265 = scmp.eq.s32.totalorder %s32, 0
      %p266 = por %p264, %p265
      %p267 = scmp.ne.s32.totalorder %s259, %s261
      %p268 = scmp.eq.s32.totalorder %s37, 3
      %p269 = por %p267, %p268
      %p270 = scmp.ne.s32.totalorder %s261, %s262
      %p271 = scmp.eq.s32.totalorder %s37, 0
      %p272 = por %p270, %p271
      %p273 = scmp.ne.s32.totalorder %s261, %s262
      %p274 = scmp.eq.s32.totalorder %s38, 3
      %p275 = por %p273, %p274
      %p277 = scmp.ne.s32.totalorder %s262, %s276
      %p278 = scmp.eq.s32.totalorder %s38, 0
      %p279 = por %p277, %p278
      %s281 = sadd.s32 %s280, 1
      %p284 = scmp.eq.s32.totalorder %s32, 3
      %p285 = scmp.ne.s32.totalorder %s280, %s282
      %p286 = scmp.eq.s32.totalorder %s32, 0
      %p287 = por %p285, %p286
      %p288 = scmp.ne.s32.totalorder %s280, %s282
      %p289 = scmp.eq.s32.totalorder %s37, 3
      %p290 = por %p288, %p289
      %p291 = scmp.ne.s32.totalorder %s282, %s283
      %p292 = scmp.eq.s32.totalorder %s37, 0
      %p293 = por %p291, %p292
      %p294 = scmp.ne.s32.totalorder %s282, %s283
      %p295 = scmp.eq.s32.totalorder %s38, 3
      %p296 = por %p294, %p295
      %p298 = scmp.ne.s32.totalorder %s283, %s297
      %p299 = scmp.eq.s32.totalorder %s38, 0
      %p300 = por %p298, %p299
      %s302 = sadd.s32 %s301, 1
      %p305 = scmp.eq.s32.totalorder %s32, 3
      %p306 = scmp.ne.s32.totalorder %s301, %s303
      %p307 = scmp.eq.s32.totalorder %s32, 0
      %p308 = por %p306, %p307
      %p309 = scmp.ne.s32.totalorder %s301, %s303
      %p310 = scmp.eq.s32.totalorder %s37, 3
      %p311 = por %p309, %p310
      %p312 = scmp.ne.s32.totalorder %s303, %s304
      %p313 = scmp.eq.s32.totalorder %s37, 0
      %p314 = por %p312, %p313
      %p315 = scmp.ne.s32.totalorder %s303, %s304
      %p316 = scmp.eq.s32.totalorder %s38, 3
      %p317 = por %p315, %p316
      %p319 = scmp.ne.s32.totalorder %s304, %s318
      %p320 = scmp.eq.s32.totalorder %s38, 0
      %p321 = por %p319, %p320
      %s323 = sadd.s32 %s322, 1
      %p326 = scmp.eq.s32.totalorder %s32, 3
      %p327 = scmp.ne.s32.totalorder %s322, %s324
      %p328 = scmp.eq.s32.totalorder %s32, 0
      %p329 = por %p327, %p328
      %p330 = scmp.ne.s32.totalorder %s322, %s324
      %p331 = scmp.eq.s32.totalorder %s37, 3
      %p332 = por %p330, %p331
      %p333 = scmp.ne.s32.totalorder %s324, %s325
      %p334 = scmp.eq.s32.totalorder %s37, 0
      %p335 = por %p333, %p334
      %p336 = scmp.ne.s32.totalorder %s324, %s325
      %p337 = scmp.eq.s32.totalorder %s38, 3
      %p338 = por %p336, %p337
      %p340 = scmp.ne.s32.totalorder %s325, %s339
      %p341 = scmp.eq.s32.totalorder %s38, 0
      %p342 = por %p340, %p341
      %s344 = sadd.s32 %s343, 1
      %p347 = scmp.eq.s32.totalorder %s32, 3
      %p348 = scmp.ne.s32.totalorder %s343, %s345
      %p349 = scmp.eq.s32.totalorder %s32, 0
      %p350 = por %p348, %p349
      %p351 = scmp.ne.s32.totalorder %s343, %s345
      %p352 = scmp.eq.s32.totalorder %s37, 3
      %p353 = por %p351, %p352
      %p354 = scmp.ne.s32.totalorder %s345, %s346
      %p355 = scmp.eq.s32.totalorder %s37, 0
      %p356 = por %p354, %p355
      %p357 = scmp.ne.s32.totalorder %s345, %s346
      %p358 = scmp.eq.s32.totalorder %s38, 3
      %p359 = por %p357, %p358
      %p361 = scmp.ne.s32.totalorder %s346, %s360
      %p362 = scmp.eq.s32.totalorder %s38, 0
      %p363 = por %p361, %p362
      %s364 = ssub.s32 %s32, %s39
      %p365 = scmp.eq.s32.totalorder %s364, 0
      %s367 = sadd.s32 %s366, 1
      %s368 = scalar_select %p365, %s366, %s367
      %p371 = pneg %p365
      %p372 = scmp.eq.s32.totalorder %s32, 3
      %p373 = por %p371, %p372
      %p374 = scmp.ne.s32.totalorder %s366, %s369
      %p375 = scmp.eq.s32.totalorder %s32, 0
      %p376 = por %p374, %p375
      %p377 = scmp.ne.s32.totalorder %s366, %s369
      %p378 = scmp.eq.s32.totalorder %s37, 3
      %p379 = por %p377, %p378
      %p380 = scmp.ne.s32.totalorder %s369, %s370
      %p381 = scmp.eq.s32.totalorder %s37, 0
      %p382 = por %p380, %p381
      %p383 = scmp.ne.s32.totalorder %s369, %s370
      %p384 = scmp.eq.s32.totalorder %s38, 3
      %p385 = por %p383, %p384
      %p387 = scmp.ne.s32.totalorder %s370, %s386
      %p388 = scmp.eq.s32.totalorder %s38, 0
      %p389 = por %p387, %p388
      %p390 = scmp.le.s32.totalorder 1, %s32
      %p391 = scmp.lt.s32.totalorder %s32, 5
      %p392 = pnand %p390, %p391
      %p393 = pneg %p392
      // Predicated region
      $region9: #{tpu_custom_call.1} parent=5 // pred_check
        _
      $region10: #{tpu_custom_call.1} parent=5 // pred_check_branch
        %395 = sbr.rel (%p392) target = $region12
      $region11: #{tpu_custom_call.1} parent=5 // pred_region
        %s396 = ssub.s32 %s32, 1
        // Predicated region
        $region13: #{tpu_custom_call.1} parent=11 // pred_check
          %p397 = pneg %p131
        $region14: #{tpu_custom_call.1} parent=11 // pred_check_branch
          %399 = sbr.rel (%p397) target = $region16
        $region15: #{tpu_custom_call.1} parent=11 // pred_region
          %401 = vsyncadd [#allocation6], 0
          %s402 = sshll.u32 %s3, 4
          %s403 = int_to_ptr.hbm [resolvable:$true] %s402
          %s404 = sshll.u32 [#allocation7], 4
          %s405 = int_to_ptr.vmem [resolvable:$true] %s404
          %410 = dma.hbm_to_vmem [thread:$0]  %s403, 512, %s405, [#allocation6], 64, 64, 4
        $region16: #{tpu_custom_call.1} parent=11 // pred_fallthru
          _
        // Predicated region
        $region17: #{tpu_custom_call.1} parent=11 // pred_check
          %p411 = pneg %p152
        $region18: #{tpu_custom_call.1} parent=11 // pred_check_branch
          %413 = sbr.rel (%p411) target = $region20
        $region19: #{tpu_custom_call.1} parent=11 // pred_region
          _
        $region20: #{tpu_custom_call.1} parent=11 // pred_fallthru
          _
        // Predicated region
        $region21: #{tpu_custom_call.1} parent=11 // pred_check
          %p414 = pneg %p251
        $region22: #{tpu_custom_call.1} parent=11 // pred_check_branch
          %416 = sbr.rel (%p414) target = $region24
        $region23: #{tpu_custom_call.1} parent=11 // pred_region
          _
        $region24: #{tpu_custom_call.1} parent=11 // pred_fallthru
          _
        // Predicated region
        $region25: #{tpu_custom_call.1} parent=11 // pred_check
          %p417 = pneg %p272
        $region26: #{tpu_custom_call.1} parent=11 // pred_check_branch
          %419 = sbr.rel (%p417) target = $region28
        $region27: #{tpu_custom_call.1} parent=11 // pred_region
          _
        $region28: #{tpu_custom_call.1} parent=11 // pred_fallthru
          _
        // Predicated region
        $region29: #{tpu_custom_call.1} parent=11 // pred_check
          %p420 = pneg %p293
        $region30: #{tpu_custom_call.1} parent=11 // pred_check_branch
          %422 = sbr.rel (%p420) target = $region32
        $region31: #{tpu_custom_call.1} parent=11 // pred_region
          _
        $region32: #{tpu_custom_call.1} parent=11 // pred_fallthru
          _
        // Predicated region
        $region33: #{tpu_custom_call.1} parent=11 // pred_check
          %p423 = pneg %p314
        $region34: #{tpu_custom_call.1} parent=11 // pred_check_branch
          %425 = sbr.rel (%p423) target = $region36
        $region35: #{tpu_custom_call.1} parent=11 // pred_region
          _
        $region36: #{tpu_custom_call.1} parent=11 // pred_fallthru
          _
        // Predicated region
        $region37: #{tpu_custom_call.1} parent=11 // pred_check
          %p426 = pneg %p335
        $region38: #{tpu_custom_call.1} parent=11 // pred_check_branch
          %428 = sbr.rel (%p426) target = $region40
        $region39: #{tpu_custom_call.1} parent=11 // pred_region
          %430 = vsyncadd [#allocation9], 0
          %s431 = sshll.u32 %s12, 4
          %s432 = int_to_ptr.hbm [resolvable:$true] %s431
          %s433 = sshll.u32 [#allocation10], 4
          %s434 = int_to_ptr.vmem [resolvable:$true] %s433
          %439 = dma.hbm_to_vmem [thread:$0]  %s432, 1024, %s434, [#allocation9], 64, 64, 4
        $region40: #{tpu_custom_call.1} parent=11 // pred_fallthru
          _
        // Predicated region
        $region41: #{tpu_custom_call.1} parent=11 // pred_check
          %p440 = pneg %p356
        $region42: #{tpu_custom_call.1} parent=11 // pred_check_branch
          %442 = sbr.rel (%p440) target = $region44
        $region43: #{tpu_custom_call.1} parent=11 // pred_region
          _
        $region44: #{tpu_custom_call.1} parent=11 // pred_fallthru
          _
      $region12: #{tpu_custom_call.1} parent=5 // pred_fallthru
        _
      %p443 = scmp.lt.s32.totalorder %s32, 4
      // Predicated region
      $region45: #{tpu_custom_call.1} parent=5 // pred_check
        %p444 = pneg %p443
      $region46: #{tpu_custom_call.1} parent=5 // pred_check_branch
        %446 = sbr.rel (%p444) target = $region48
      $region47: #{tpu_custom_call.1} parent=5 // pred_region
        // Predicated region
        $region49: #{tpu_custom_call.1} parent=47 // pred_check
          %p447 = pneg %p52
        $region50: #{tpu_custom_call.1} parent=47 // pred_check_branch
          %449 = sbr.rel (%p447) target = $region52
        $region51: #{tpu_custom_call.1} parent=47 // pred_region
          %p450 = scmp.lt.s32.totalorder %s32, 3
          %s451 = scalar_select %p450, %s32, 3
          %s452 = smul.addr %s451, 8
          %s453 = smul.addr %s452, 8
          %s454 = scalar_lea.vmem %s0, %s453
        $region52: #{tpu_custom_call.1} parent=47 // pred_fallthru
          _
        // Predicated region
        $region53: #{tpu_custom_call.1} parent=47 // pred_check
          %p455 = pneg %p78
        $region54: #{tpu_custom_call.1} parent=47 // pred_check_branch
          %457 = sbr.rel (%p455) target = $region56
        $region55: #{tpu_custom_call.1} parent=47 // pred_region
          %s458 = sand.u32 %s68, 1
          %s459 = scalar_lea.sflag [#allocation3], %s458
          %s460 = sand.u32 %s68, 1
          %s461 = smul.addr %s460, 256
          %s462 = scalar_lea.vmem [#allocation2], %s461
          %464 = vsyncadd %s459, 0
          %s465 = smul.addr %s32, 64
          %s466 = smul.addr %s465, 4
          %s467 = scalar_lea.hbm %s1, %s466
          %s468 = sshll.u32 %s467, 4
          %s469 = int_to_ptr.hbm [resolvable:$true] %s468
          %s470 = sshll.u32 %s462, 4
          %s471 = int_to_ptr.vmem [resolvable:$true] %s470
          %476 = dma.hbm_to_vmem [thread:$0]  %s469, 4096, %s471, %s459, 128, 128, 8
        $region56: #{tpu_custom_call.1} parent=47 // pred_fallthru
          _
        // Predicated region
        $region57: #{tpu_custom_call.1} parent=47 // pred_check
          %p477 = pneg %p104
        $region58: #{tpu_custom_call.1} parent=47 // pred_check_branch
          %479 = sbr.rel (%p477) target = $region60
        $region59: #{tpu_custom_call.1} parent=47 // pred_region
          %s480 = sand.u32 %s32, 1
          %s481 = scalar_lea.sflag [#allocation6], %s480
          %s482 = sand.u32 %s94, 1
          %s483 = smul.addr %s482, 2
          %s484 = scalar_lea.vmem [#allocation5], %s483
          %486 = vsyncadd %s481, 0
          %s487 = smul.addr %s32, 2
          %s488 = scalar_lea.hbm %s2, %s487
          %s490 = sshll.u32 %s488, 4
          %s491 = int_to_ptr.hbm [resolvable:$true] %s490
          %s492 = sshll.u32 %s484, 4
          %s493 = int_to_ptr.vmem [resolvable:$true] %s492
          %495 = dma.hbm_to_vmem [thread:$0]  %s491, 32, %s493, %s481
        $region60: #{tpu_custom_call.1} parent=47 // pred_fallthru
          _
        // Predicated region
        $region61: #{tpu_custom_call.1} parent=47 // pred_check
          %p496 = pneg %p172
        $region62: #{tpu_custom_call.1} parent=47 // pred_check_branch
          %498 = sbr.rel (%p496) target = $region64
        $region63: #{tpu_custom_call.1} parent=47 // pred_region
          %s499 = sand.u32 %s32, 1
          %s500 = scalar_lea.sflag [#allocation9], %s499
          %s501 = sand.u32 %s162, 1
          %s502 = smul.addr %s501, 32
          %s503 = scalar_lea.vmem [#allocation8], %s502
          %505 = vsyncadd %s500, 0
          %s506 = smul.addr %s32, 8
          %s507 = smul.addr %s506, 4
          %s508 = scalar_lea.hbm %s5, %s507
          %s509 = sshll.u32 %s508, 4
          %s510 = int_to_ptr.hbm [resolvable:$true] %s509
          %s511 = sshll.u32 %s503, 4
          %s512 = int_to_ptr.vmem [resolvable:$true] %s511
          %517 = dma.hbm_to_vmem [thread:$0]  %s510, 512, %s512, %s500, 128, 128, 8
        $region64: #{tpu_custom_call.1} parent=47 // pred_fallthru
          _
        // Predicated region
        $region65: #{tpu_custom_call.1} parent=47 // pred_check
          %p518 = pneg %p198
        $region66: #{tpu_custom_call.1} parent=47 // pred_check_branch
          %520 = sbr.rel (%p518) target = $region68
        $region67: #{tpu_custom_call.1} parent=47 // pred_region
          %p521 = scmp.lt.s32.totalorder %s32, 3
          %s522 = scalar_select %p521, %s32, 3
          %s523 = smul.addr %s522, 4
          %s524 = smul.addr %s523, 8
          %s525 = scalar_lea.vmem %s6, %s524
        $region68: #{tpu_custom_call.1} parent=47 // pred_fallthru
          _
        // Predicated region
        $region69: #{tpu_custom_call.1} parent=47 // pred_check
          %p526 = pneg %p224
        $region70: #{tpu_custom_call.1} parent=47 // pred_check_branch
          %528 = sbr.rel (%p526) target = $region72
        $region71: #{tpu_custom_call.1} parent=47 // pred_region
          %p529 = scmp.lt.s32.totalorder %s32, 3
          %s530 = scalar_select %p529, %s32, 3
          %s531 = smul.addr %s530, 4
          %s532 = smul.addr %s531, 8
          %s533 = scalar_lea.vmem %s7, %s532
        $region72: #{tpu_custom_call.1} parent=47 // pred_fallthru
          _
      $region48: #{tpu_custom_call.1} parent=5 // pred_fallthru
        _
      %p534 = scmp.le.s32.totalorder 1, %s32
      %p535 = scmp.lt.s32.totalorder %s32, 5
      %p536 = pnand %p534, %p535
      %p537 = pneg %p536
      // Predicated region
      $region73: #{tpu_custom_call.1} parent=5 // pred_check
        _
      $region74: #{tpu_custom_call.1} parent=5 // pred_check_branch
        %539 = sbr.rel (%p536) target = $region76
      $region75: #{tpu_custom_call.1} parent=5 // pred_region
        %s540 = ssub.s32 %s32, 1
        %s541 = sand.u32 %s71, 1
        %s542 = scalar_lea.sflag [#allocation3], %s541
        %s543 = sand.u32 %s71, 1
        %s544 = smul.addr %s543, 256
        %s545 = scalar_lea.vmem [#allocation2], %s544
        // Predicated region
        $region77: #{tpu_custom_call.1} parent=75 // pred_check
          %p546 = pneg %p84
        $region78: #{tpu_custom_call.1} parent=75 // pred_check_branch
          %548 = sbr.rel (%p546) target = $region80
        $region79: #{tpu_custom_call.1} parent=75 // pred_region
          %550 = dma.done %s542, 4096
        $region80: #{tpu_custom_call.1} parent=75 // pred_fallthru
          _
        %s551 = sand.u32 %s37, 1
        %s552 = scalar_lea.sflag [#allocation6], %s551
        %s553 = sand.u32 %s97, 1
        %s554 = smul.addr %s553, 2
        %s555 = scalar_lea.vmem [#allocation5], %s554
        // Predicated region
        $region81: #{tpu_custom_call.1} parent=75 // pred_check
          %p556 = pneg %p110
        $region82: #{tpu_custom_call.1} parent=75 // pred_check_branch
          %558 = sbr.rel (%p556) target = $region84
        $region83: #{tpu_custom_call.1} parent=75 // pred_region
          %560 = dma.done %s552, 32
        $region84: #{tpu_custom_call.1} parent=75 // pred_fallthru
          _
        // Predicated region
        $region85: #{tpu_custom_call.1} parent=75 // pred_check
          %p561 = pneg %p131
        $region86: #{tpu_custom_call.1} parent=75 // pred_check_branch
          %563 = sbr.rel (%p561) target = $region88
        $region87: #{tpu_custom_call.1} parent=75 // pred_region
          %565 = dma.done [#allocation6], 512
        $region88: #{tpu_custom_call.1} parent=75 // pred_fallthru
          _
        %s566 = sand.u32 %s37, 1
        %s567 = scalar_lea.sflag [#allocation9], %s566
        %s568 = sand.u32 %s165, 1
        %s569 = smul.addr %s568, 32
        %s570 = scalar_lea.vmem [#allocation8], %s569
        // Predicated region
        $region89: #{tpu_custom_call.1} parent=75 // pred_check
          %p571 = pneg %p178
        $region90: #{tpu_custom_call.1} parent=75 // pred_check_branch
          %573 = sbr.rel (%p571) target = $region92
        $region91: #{tpu_custom_call.1} parent=75 // pred_region
          %575 = dma.done %s567, 512
        $region92: #{tpu_custom_call.1} parent=75 // pred_fallthru
          _
        // Predicated region
        $region93: #{tpu_custom_call.1} parent=75 // pred_check
          %p576 = pneg %p335
        $region94: #{tpu_custom_call.1} parent=75 // pred_check_branch
          %578 = sbr.rel (%p576) target = $region96
        $region95: #{tpu_custom_call.1} parent=75 // pred_region
          %580 = dma.done [#allocation9], 1024
        $region96: #{tpu_custom_call.1} parent=75 // pred_fallthru
          _
        %p581 = scmp.lt.s32.totalorder %s37, 3
        %s582 = scalar_select %p581, %s37, 3
        %s583 = smul.addr %s582, 8
        %s584 = smul.addr %s583, 8
        %s585 = scalar_lea.vmem %s0, %s584
        %p586 = pneg %p58
        %p587 = pneg %p55
        %s588 = sand.u32 %s71, 1
        %s589 = scalar_lea.sflag [#allocation3], %s588
        %s590 = sand.u32 %s71, 1
        %s591 = smul.addr %s590, 256
        %s592 = scalar_lea.vmem [#allocation2], %s591
        %p593 = pneg %p84
        %p594 = pneg %p81
        %s595 = sand.u32 %s37, 1
        %s596 = scalar_lea.sflag [#allocation6], %s595
        %s597 = sand.u32 %s97, 1
        %s598 = smul.addr %s597, 2
        %s599 = scalar_lea.vmem [#allocation5], %s598
        %p600 = pneg %p110
        %p601 = pneg %p107
        %p602 = pneg %p131
        %p603 = pneg %p128
        %p604 = pneg %p152
        %p605 = pneg %p149
        %s606 = sand.u32 %s37, 1
        %s607 = scalar_lea.sflag [#allocation9], %s606
        %s608 = sand.u32 %s165, 1
        %s609 = smul.addr %s608, 32
        %s610 = scalar_lea.vmem [#allocation8], %s609
        %p611 = pneg %p178
        %p612 = pneg %p175
        %p613 = scmp.lt.s32.totalorder %s37, 3
        %s614 = scalar_select %p613, %s37, 3
        %s615 = smul.addr %s614, 4
        %s616 = smul.addr %s615, 8
        %s617 = scalar_lea.vmem %s6, %s616
        %p618 = pneg %p204
        %p619 = pneg %p201
        %p620 = scmp.lt.s32.totalorder %s37, 3
        %s621 = scalar_select %p620, %s37, 3
        %s622 = smul.addr %s621, 4
        %s623 = smul.addr %s622, 8
        %s624 = scalar_lea.vmem %s7, %s623
        %p625 = pneg %p230
        %p626 = pneg %p227
        %p627 = pneg %p251
        %p628 = pneg %p248
        %p629 = pneg %p272
        %p630 = pneg %p269
        %p631 = pneg %p293
        %p632 = pneg %p290
        %p633 = pneg %p314
        %p634 = pneg %p311
        %p635 = pneg %p335
        %p636 = pneg %p332
        %p637 = pneg %p356
        %p638 = pneg %p353
        %p639 = pneg %p382
        %p640 = pneg %p379
        %s641 = sand.u32 %s369, 1
        %s642 = scalar_lea.sflag [#allocation4], %s641
        %s643 = sand.u32 %s369, 1
        %s644 = smul.addr %s643, 32
        %s645 = scalar_lea.vmem [#allocation11], %s644
        %p646 = scmp.lt.s32.totalorder %s37, 3
        %s647 = scalar_select %p646, %s37, 3
        %s648 = smul.addr %s647, 8
        %s649 = smul.addr %s648, 8
        %s650 = scalar_lea.vmem %s0, %s649
        %p651 = scmp.lt.s32.totalorder %s37, 3
        %s652 = scalar_select %p651, %s37, 3
        %s653 = smul.addr %s652, 4
        %s654 = smul.addr %s653, 8
        %s655 = scalar_lea.vmem %s6, %s654
        %p656 = scmp.lt.s32.totalorder %s37, 3
        %s657 = scalar_select %p656, %s37, 3
        %s658 = smul.addr %s657, 4
        %s659 = smul.addr %s658, 8
        %s660 = scalar_lea.vmem %s7, %s659
        %v662 = vld [vmem:[%s650] sm:$0xff]
        %v663 = vld [vmem:[%s650 + $0x8] sm:$0xff]
        %v664 = vld [vmem:[%s650 + $0x10] sm:$0xff]
        %v665 = vld [vmem:[%s650 + $0x18] sm:$0xff]
        %v666 = vld [vmem:[%s650 + $0x20] sm:$0xff]
        %v667 = vld [vmem:[%s650 + $0x28] sm:$0xff]
        %v668 = vld [vmem:[%s650 + $0x30] sm:$0xff]
        %v669 = vld [vmem:[%s650 + $0x38] sm:$0xff]
        %v670 = vld [vmem:[%s545] sm:$0xff]
        %v671 = vld [vmem:[%s545 + $0x8] sm:$0xff]
        %v672 = vld [vmem:[%s545 + $0x10] sm:$0xff]
        %v673 = vld [vmem:[%s545 + $0x18] sm:$0xff]
        %v674 = vld [vmem:[%s545 + $0x20] sm:$0xff]
        %v675 = vld [vmem:[%s545 + $0x28] sm:$0xff]
        %v676 = vld [vmem:[%s545 + $0x30] sm:$0xff]
        %v677 = vld [vmem:[%s545 + $0x38] sm:$0xff]
        %v678 = vld [vmem:[%s545 + $0x40] sm:$0xff]
        %v679 = vld [vmem:[%s545 + $0x48] sm:$0xff]
        %v680 = vld [vmem:[%s545 + $0x50] sm:$0xff]
        %v681 = vld [vmem:[%s545 + $0x58] sm:$0xff]
        %v682 = vld [vmem:[%s545 + $0x60] sm:$0xff]
        %v683 = vld [vmem:[%s545 + $0x68] sm:$0xff]
        %v684 = vld [vmem:[%s545 + $0x70] sm:$0xff]
        %v685 = vld [vmem:[%s545 + $0x78] sm:$0xff]
        %v686 = vld [vmem:[%s545 + $0x80] sm:$0xff]
        %v687 = vld [vmem:[%s545 + $0x88] sm:$0xff]
        %v688 = vld [vmem:[%s545 + $0x90] sm:$0xff]
        %v689 = vld [vmem:[%s545 + $0x98] sm:$0xff]
        %v690 = vld [vmem:[%s545 + $0xa0] sm:$0xff]
        %v691 = vld [vmem:[%s545 + $0xa8] sm:$0xff]
        %v692 = vld [vmem:[%s545 + $0xb0] sm:$0xff]
        %v693 = vld [vmem:[%s545 + $0xb8] sm:$0xff]
        %v694 = vld [vmem:[%s545 + $0xc0] sm:$0xff]
        %v695 = vld [vmem:[%s545 + $0xc8] sm:$0xff]
        %v696 = vld [vmem:[%s545 + $0xd0] sm:$0xff]
        %v697 = vld [vmem:[%s545 + $0xd8] sm:$0xff]
        %v698 = vld [vmem:[%s545 + $0xe0] sm:$0xff]
        %v699 = vld [vmem:[%s545 + $0xe8] sm:$0xff]
        %v700 = vld [vmem:[%s545 + $0xf0] sm:$0xff]
        %v701 = vld [vmem:[%s545 + $0xf8] sm:$0xff]
        %v702 = vld [vmem:[%s555] sm:$0x3]
        %v703 = vld [vmem:[#allocation7] sm:$0xf]
        %v704 = vld [vmem:[#allocation7 + $0x4] sm:$0xf]
        %v705 = vld [vmem:[#allocation7 + $0x8] sm:$0xf]
        %v706 = vld [vmem:[#allocation7 + $0xc] sm:$0xf]
        %v707 = vpack.c.bf16 %v664, %v662
        %v708 = vpack.c.bf16 %v665, %v663
        %v709 = vpack.c.bf16 %v668, %v666
        %v710 = vpack.c.bf16 %v669, %v667
        %v711 = vld [vmem:[%s4] sm:$0xff]
        %v712 = vld [vmem:[%s4 + $0x8] sm:$0xff]
        %v713 = vld [vmem:[%s4 + $0x10] sm:$0xff]
        %v714 = vld [vmem:[%s4 + $0x18] sm:$0xff]
        %716 = vset.pattern.permute.xlu0 0
        %717 = vperm.xlu0 %716, %v711
        %v718 = vpop.permute.xlu0 %717
        %721 = vset.pattern.permute.xlu0 0
        %722 = vperm.xlu0 %721, %v712
        %v723 = vpop.permute.xlu0 %722
        %726 = vset.pattern.permute.xlu0 0
        %727 = vperm.xlu0 %726, %v713
        %v728 = vpop.permute.xlu0 %727
        %731 = vset.pattern.permute.xlu0 0
        %732 = vperm.xlu0 %731, %v714
        %v733 = vpop.permute.xlu0 %732
        %v739 = vunpack.c.l.b16 %v703
        %v740 = vunpack.c.l.b16 %v704
        %v741 = vunpack.c.l.b16 %v705
        %v742 = vunpack.c.l.b16 %v706
        %v743 = vpack.c.b16 %v740, %v739
        %v744 = vpack.c.b16 %v742, %v741
        %vm745 = vcmask 261120
        %v747 = vsel %vm745, %v743, 0
        %v750 = vsel %vm745, %v744, 0
        %752 = vmatpush.bf16.msra.mxu0 0
        %753 = vmatpush.bf16.msra.mxu0 0
        %754 = vmatpush.bf16.msra.mxu0 0
        %755 = vmatpush.bf16.msra.mxu0 0
        %756 = vmatpush.bf16.msra.mxu0 0
        %757 = vmatpush.bf16.msra.mxu0 0
        %758 = vmatpush.bf16.msra.mxu0 %v709
        %759 = vmatpush.bf16.msra.mxu0 %v707
        %760 = vmatmul.bf16.gmra.mxu0 %v747
        %v761 = vpop.f32.mrf.mxu0
        %v762 = vadd.f32 %v718, %v761
        %v763 = vpop.f32.mrf.mxu0
        %v764 = vadd.f32 %v723, %v763
        %765 = vmatmul.bf16.gmra.mxu0 %v750
        %v766 = vpop.f32.mrf.mxu0
        %v767 = vadd.f32 %v728, %v766
        %v768 = vpop.f32.mrf.mxu0
        %v769 = vadd.f32 %v733, %v768
        %770 = vdwg.mxu0
        %771 = vmatpush.bf16.msra.mxu0 0
        %772 = vmatpush.bf16.msra.mxu0 0
        %773 = vmatpush.bf16.msra.mxu0 0
        %774 = vmatpush.bf16.msra.mxu0 0
        %775 = vmatpush.bf16.msra.mxu0 0
        %776 = vmatpush.bf16.msra.mxu0 0
        %777 = vmatpush.bf16.msra.mxu0 %v710
        %778 = vmatpush.bf16.msra.mxu0 %v708
        %779 = vmatmul.bf16.gmra.mxu0 %v747
        %v780 = vpop.f32.mrf.mxu0
        %v781 = vadd.f32 %v718, %v780
        %v782 = vpop.f32.mrf.mxu0
        %v783 = vadd.f32 %v723, %v782
        %784 = vmatmul.bf16.gmra.mxu0 %v750
        %v785 = vpop.f32.mrf.mxu0
        %v786 = vadd.f32 %v728, %v785
        %v787 = vpop.f32.mrf.mxu0
        %v788 = vadd.f32 %v733, %v787
        %789 = vdwg.mxu0
        %v790 = vmax.f32 %v762, 0.0
        %v791 = vmax.f32 %v781, 0.0
        %v792 = vmax.f32 %v764, 0.0
        %v793 = vmax.f32 %v783, 0.0
        %v794 = vmax.f32 %v767, 0.0
        %v795 = vmax.f32 %v786, 0.0
        %v796 = vmax.f32 %v769, 0.0
        %v797 = vmax.f32 %v788, 0.0
        %v798 = vpack.c.bf16 %v792, %v790
        %v799 = vpack.c.bf16 %v793, %v791
        %v800 = vpack.c.bf16 %v796, %v794
        %v801 = vpack.c.bf16 %v797, %v795
        %v834 = vunpack.c.l.b16 %v670
        %v835 = vunpack.c.h.b16 %v670
        %v836 = vunpack.c.l.b16 %v671
        %v837 = vunpack.c.h.b16 %v671
        %v838 = vunpack.c.l.b16 %v672
        %v839 = vunpack.c.h.b16 %v672
        %v840 = vunpack.c.l.b16 %v673
        %v841 = vunpack.c.h.b16 %v673
        %v842 = vunpack.c.l.b16 %v674
        %v843 = vunpack.c.h.b16 %v674
        %v844 = vunpack.c.l.b16 %v675
        %v845 = vunpack.c.h.b16 %v675
        %v846 = vunpack.c.l.b16 %v676
        %v847 = vunpack.c.h.b16 %v676
        %v848 = vunpack.c.l.b16 %v677
        %v849 = vunpack.c.h.b16 %v677
        %v850 = vunpack.c.l.b16 %v678
        %v851 = vunpack.c.h.b16 %v678
        %v852 = vunpack.c.l.b16 %v679
        %v853 = vunpack.c.h.b16 %v679
        %v854 = vunpack.c.l.b16 %v680
        %v855 = vunpack.c.h.b16 %v680
        %v856 = vunpack.c.l.b16 %v681
        %v857 = vunpack.c.h.b16 %v681
        %v858 = vunpack.c.l.b16 %v682
        %v859 = vunpack.c.h.b16 %v682
        %v860 = vunpack.c.l.b16 %v683
        %v861 = vunpack.c.h.b16 %v683
        %v862 = vunpack.c.l.b16 %v684
        %v863 = vunpack.c.h.b16 %v684
        %v864 = vunpack.c.l.b16 %v685
        %v865 = vunpack.c.h.b16 %v685
        %v866 = vunpack.c.l.b16 %v686
        %v867 = vunpack.c.h.b16 %v686
        %v868 = vunpack.c.l.b16 %v687
        %v869 = vunpack.c.h.b16 %v687
        %v870 = vunpack.c.l.b16 %v688
        %v871 = vunpack.c.h.b16 %v688
        %v872 = vunpack.c.l.b16 %v689
        %v873 = vunpack.c.h.b16 %v689
        %v874 = vunpack.c.l.b16 %v690
        %v875 = vunpack.c.h.b16 %v690
        %v876 = vunpack.c.l.b16 %v691
        %v877 = vunpack.c.h.b16 %v691
        %v878 = vunpack.c.l.b16 %v692
        %v879 = vunpack.c.h.b16 %v692
        %v880 = vunpack.c.l.b16 %v693
        %v881 = vunpack.c.h.b16 %v693
        %v882 = vunpack.c.l.b16 %v694
        %v883 = vunpack.c.h.b16 %v694
        %v884 = vunpack.c.l.b16 %v695
        %v885 = vunpack.c.h.b16 %v695
        %v886 = vunpack.c.l.b16 %v696
        %v887 = vunpack.c.h.b16 %v696
        %v888 = vunpack.c.l.b16 %v697
        %v889 = vunpack.c.h.b16 %v697
        %v890 = vunpack.c.l.b16 %v698
        %v891 = vunpack.c.h.b16 %v698
        %v892 = vunpack.c.l.b16 %v699
        %v893 = vunpack.c.h.b16 %v699
        %v894 = vunpack.c.l.b16 %v700
        %v895 = vunpack.c.h.b16 %v700
        %v896 = vunpack.c.l.b16 %v701
        %v897 = vunpack.c.h.b16 %v701
        %v898 = vpack.c.b16 %v836, %v834
        %v899 = vpack.c.b16 %v837, %v835
        %v900 = vpack.c.b16 %v840, %v838
        %v901 = vpack.c.b16 %v841, %v839
        %v902 = vpack.c.b16 %v844, %v842
        %v903 = vpack.c.b16 %v845, %v843
        %v904 = vpack.c.b16 %v848, %v846
        %v905 = vpack.c.b16 %v849, %v847
        %v906 = vpack.c.b16 %v852, %v850
        %v907 = vpack.c.b16 %v853, %v851
        %v908 = vpack.c.b16 %v856, %v854
        %v909 = vpack.c.b16 %v857, %v855
        %v910 = vpack.c.b16 %v860, %v858
        %v911 = vpack.c.b16 %v861, %v859
        %v912 = vpack.c.b16 %v864, %v862
        %v913 = vpack.c.b16 %v865, %v863
        %v914 = vpack.c.b16 %v868, %v866
        %v915 = vpack.c.b16 %v869, %v867
        %v916 = vpack.c.b16 %v872, %v870
        %v917 = vpack.c.b16 %v873, %v871
        %v918 = vpack.c.b16 %v876, %v874
        %v919 = vpack.c.b16 %v877, %v875
        %v920 = vpack.c.b16 %v880, %v878
        %v921 = vpack.c.b16 %v881, %v879
        %v922 = vpack.c.b16 %v884, %v882
        %v923 = vpack.c.b16 %v885, %v883
        %v924 = vpack.c.b16 %v888, %v886
        %v925 = vpack.c.b16 %v889, %v887
        %v926 = vpack.c.b16 %v892, %v890
        %v927 = vpack.c.b16 %v893, %v891
        %v928 = vpack.c.b16 %v896, %v894
        %v929 = vpack.c.b16 %v897, %v895
        %962 = vmatpush.bf16.msra.mxu0 %v912
        %963 = vmatpush.bf16.msra.mxu0 %v910
        %964 = vmatpush.bf16.msra.mxu0 %v908
        %965 = vmatpush.bf16.msra.mxu0 %v906
        %966 = vmatpush.bf16.msra.mxu0 %v904
        %967 = vmatpush.bf16.msra.mxu0 %v902
        %968 = vmatpush.bf16.msra.mxu0 %v900
        %969 = vmatpush.bf16.msra.mxu0 %v898
        %970 = vmatmul.bf16.gmra.mxu0 %v798
        %v971 = vpop.f32.mrf.mxu0
        %v972 = vadd.f32 0.0, %v971
        %v973 = vpop.f32.mrf.mxu0
        %v974 = vadd.f32 0.0, %v973
        %975 = vmatmul.bf16.gmra.mxu0 %v800
        %v976 = vpop.f32.mrf.mxu0
        %v977 = vadd.f32 0.0, %v976
        %v978 = vpop.f32.mrf.mxu0
        %v979 = vadd.f32 0.0, %v978
        %980 = vdwg.mxu0
        %981 = vmatpush.bf16.msra.mxu0 %v928
        %982 = vmatpush.bf16.msra.mxu0 %v926
        %983 = vmatpush.bf16.msra.mxu0 %v924
        %984 = vmatpush.bf16.msra.mxu0 %v922
        %985 = vmatpush.bf16.msra.mxu0 %v920
        %986 = vmatpush.bf16.msra.mxu0 %v918
        %987 = vmatpush.bf16.msra.mxu0 %v916
        %988 = vmatpush.bf16.msra.mxu0 %v914
        %989 = vmatmul.bf16.gmra.mxu0 %v799
        %v990 = vpop.f32.mrf.mxu0
        %v991 = vadd.f32 %v972, %v990
        %v992 = vpop.f32.mrf.mxu0
        %v993 = vadd.f32 %v974, %v992
        %994 = vmatmul.bf16.gmra.mxu0 %v801
        %v995 = vpop.f32.mrf.mxu0
        %v996 = vadd.f32 %v977, %v995
        %v997 = vpop.f32.mrf.mxu0
        %v998 = vadd.f32 %v979, %v997
        %999 = vdwg.mxu0
        %1000 = vmatpush.bf16.msra.mxu0 %v913
        %1001 = vmatpush.bf16.msra.mxu0 %v911
        %1002 = vmatpush.bf16.msra.mxu0 %v909
        %1003 = vmatpush.bf16.msra.mxu0 %v907
        %1004 = vmatpush.bf16.msra.mxu0 %v905
        %1005 = vmatpush.bf16.msra.mxu0 %v903
        %1006 = vmatpush.bf16.msra.mxu0 %v901
        %1007 = vmatpush.bf16.msra.mxu0 %v899
        %1008 = vmatmul.bf16.gmra.mxu0 %v798
        %v1009 = vpop.f32.mrf.mxu0
        %v1010 = vadd.f32 0.0, %v1009
        %v1011 = vpop.f32.mrf.mxu0
        %v1012 = vadd.f32 0.0, %v1011
        %1013 = vmatmul.bf16.gmra.mxu0 %v800
        %v1014 = vpop.f32.mrf.mxu0
        %v1015 = vadd.f32 0.0, %v1014
        %v1016 = vpop.f32.mrf.mxu0
        %v1017 = vadd.f32 0.0, %v1016
        %1018 = vdwg.mxu0
        %1019 = vmatpush.bf16.msra.mxu0 %v929
        %1020 = vmatpush.bf16.msra.mxu0 %v927
        %1021 = vmatpush.bf16.msra.mxu0 %v925
        %1022 = vmatpush.bf16.msra.mxu0 %v923
        %1023 = vmatpush.bf16.msra.mxu0 %v921
        %1024 = vmatpush.bf16.msra.mxu0 %v919
        %1025 = vmatpush.bf16.msra.mxu0 %v917
        %1026 = vmatpush.bf16.msra.mxu0 %v915
        %1027 = vmatmul.bf16.gmra.mxu0 %v799
        %v1028 = vpop.f32.mrf.mxu0
        %v1029 = vadd.f32 %v1010, %v1028
        %v1030 = vpop.f32.mrf.mxu0
        %v1031 = vadd.f32 %v1012, %v1030
        %1032 = vmatmul.bf16.gmra.mxu0 %v801
        %v1033 = vpop.f32.mrf.mxu0
        %v1034 = vadd.f32 %v1015, %v1033
        %v1035 = vpop.f32.mrf.mxu0
        %v1036 = vadd.f32 %v1017, %v1035
        %1037 = vdwg.mxu0
        %v1039 = vperm.slane %v702, 0
        %v1040 = vperm.slane %v702, 1
        %v1043 = vmul.f32 %v991, %v1039
        %v1044 = vmul.f32 %v1029, %v1040
        %v1045 = vmul.f32 %v993, %v1039
        %v1046 = vmul.f32 %v1031, %v1040
        %v1047 = vmul.f32 %v996, %v1039
        %v1048 = vmul.f32 %v1034, %v1040
        %v1049 = vmul.f32 %v998, %v1039
        %v1050 = vmul.f32 %v1036, %v1040
        %v1051 = vadd.f32 %v662, %v1043
        %v1052 = vadd.f32 %v663, %v1044
        %v1053 = vadd.f32 %v664, %v1045
        %v1054 = vadd.f32 %v665, %v1046
        %v1055 = vadd.f32 %v666, %v1047
        %v1056 = vadd.f32 %v667, %v1048
        %v1057 = vadd.f32 %v668, %v1049
        %v1058 = vadd.f32 %v669, %v1050
        %s1059 = scalar_lea.vmem [#allocation7], 16
        %v1060 = vld [vmem:[%s1059] sm:$0xf]
        %v1061 = vld [vmem:[%s1059 + $0x4] sm:$0xf]
        %v1062 = vld [vmem:[%s1059 + $0x8] sm:$0xf]
        %v1063 = vld [vmem:[%s1059 + $0xc] sm:$0xf]
        %v1064 = vpack.c.bf16 %v1053, %v1051
        %v1065 = vpack.c.bf16 %v1054, %v1052
        %v1066 = vpack.c.bf16 %v1057, %v1055
        %v1067 = vpack.c.bf16 %v1058, %v1056
        %s1068 = scalar_lea.vmem %s4, 32
        %v1069 = vld [vmem:[%s1068] sm:$0xff]
        %v1070 = vld [vmem:[%s1068 + $0x8] sm:$0xff]
        %v1071 = vld [vmem:[%s1068 + $0x10] sm:$0xff]
        %v1072 = vld [vmem:[%s1068 + $0x18] sm:$0xff]
        %1074 = vset.pattern.permute.xlu0 0
        %1075 = vperm.xlu0 %1074, %v1069
        %v1076 = vpop.permute.xlu0 %1075
        %1079 = vset.pattern.permute.xlu0 0
        %1080 = vperm.xlu0 %1079, %v1070
        %v1081 = vpop.permute.xlu0 %1080
        %1084 = vset.pattern.permute.xlu0 0
        %1085 = vperm.xlu0 %1084, %v1071
        %v1086 = vpop.permute.xlu0 %1085
        %1089 = vset.pattern.permute.xlu0 0
        %1090 = vperm.xlu0 %1089, %v1072
        %v1091 = vpop.permute.xlu0 %1090
        %v1097 = vunpack.c.l.b16 %v1060
        %v1098 = vunpack.c.l.b16 %v1061
        %v1099 = vunpack.c.l.b16 %v1062
        %v1100 = vunpack.c.l.b16 %v1063
        %v1101 = vpack.c.b16 %v1098, %v1097
        %v1102 = vpack.c.b16 %v1100, %v1099
        %v1104 = vsel %vm745, %v1101, 0
        %v1107 = vsel %vm745, %v1102, 0
        %1109 = vmatpush.bf16.msra.mxu0 0
        %1110 = vmatpush.bf16.msra.mxu0 0
        %1111 = vmatpush.bf16.msra.mxu0 0
        %1112 = vmatpush.bf16.msra.mxu0 0
        %1113 = vmatpush.bf16.msra.mxu0 0
        %1114 = vmatpush.bf16.msra.mxu0 0
        %1115 = vmatpush.bf16.msra.mxu0 %v1066
        %1116 = vmatpush.bf16.msra.mxu0 %v1064
        %1117 = vmatmul.bf16.gmra.mxu0 %v1104
        %v1118 = vpop.f32.mrf.mxu0
        %v1119 = vadd.f32 %v1076, %v1118
        %v1120 = vpop.f32.mrf.mxu0
        %v1121 = vadd.f32 %v1081, %v1120
        %1122 = vmatmul.bf16.gmra.mxu0 %v1107
        %v1123 = vpop.f32.mrf.mxu0
        %v1124 = vadd.f32 %v1086, %v1123
        %v1125 = vpop.f32.mrf.mxu0
        %v1126 = vadd.f32 %v1091, %v1125
        %1127 = vdwg.mxu0
        %1128 = vmatpush.bf16.msra.mxu0 0
        %1129 = vmatpush.bf16.msra.mxu0 0
        %1130 = vmatpush.bf16.msra.mxu0 0
        %1131 = vmatpush.bf16.msra.mxu0 0
        %1132 = vmatpush.bf16.msra.mxu0 0
        %1133 = vmatpush.bf16.msra.mxu0 0
        %1134 = vmatpush.bf16.msra.mxu0 %v1067
        %1135 = vmatpush.bf16.msra.mxu0 %v1065
        %1136 = vmatmul.bf16.gmra.mxu0 %v1104
        %v1137 = vpop.f32.mrf.mxu0
        %v1138 = vadd.f32 %v1076, %v1137
        %v1139 = vpop.f32.mrf.mxu0
        %v1140 = vadd.f32 %v1081, %v1139
        %1141 = vmatmul.bf16.gmra.mxu0 %v1107
        %v1142 = vpop.f32.mrf.mxu0
        %v1143 = vadd.f32 %v1086, %v1142
        %v1144 = vpop.f32.mrf.mxu0
        %v1145 = vadd.f32 %v1091, %v1144
        %1146 = vdwg.mxu0
        %v1147 = vmax.f32 %v1119, 0.0
        %v1148 = vmax.f32 %v1138, 0.0
        %v1149 = vmax.f32 %v1121, 0.0
        %v1150 = vmax.f32 %v1140, 0.0
        %v1151 = vmax.f32 %v1124, 0.0
        %v1152 = vmax.f32 %v1143, 0.0
        %v1153 = vmax.f32 %v1126, 0.0
        %v1154 = vmax.f32 %v1145, 0.0
        %v1155 = vpack.c.bf16 %v1149, %v1147
        %v1156 = vpack.c.bf16 %v1150, %v1148
        %v1157 = vpack.c.bf16 %v1153, %v1151
        %v1158 = vpack.c.bf16 %v1154, %v1152
        %1159 = vmatpush.bf16.msra.mxu0 %v912
        %1160 = vmatpush.bf16.msra.mxu0 %v910
        %1161 = vmatpush.bf16.msra.mxu0 %v908
        %1162 = vmatpush.bf16.msra.mxu0 %v906
        %1163 = vmatpush.bf16.msra.mxu0 %v904
        %1164 = vmatpush.bf16.msra.mxu0 %v902
        %1165 = vmatpush.bf16.msra.mxu0 %v900
        %1166 = vmatpush.bf16.msra.mxu0 %v898
        %1167 = vmatmul.bf16.gmra.mxu0 %v1155
        %v1168 = vpop.f32.mrf.mxu0
        %v1169 = vadd.f32 0.0, %v1168
        %v1170 = vpop.f32.mrf.mxu0
        %v1171 = vadd.f32 0.0, %v1170
        %1172 = vmatmul.bf16.gmra.mxu0 %v1157
        %v1173 = vpop.f32.mrf.mxu0
        %v1174 = vadd.f32 0.0, %v1173
        %v1175 = vpop.f32.mrf.mxu0
        %v1176 = vadd.f32 0.0, %v1175
        %1177 = vdwg.mxu0
        %1178 = vmatpush.bf16.msra.mxu0 %v928
        %1179 = vmatpush.bf16.msra.mxu0 %v926
        %1180 = vmatpush.bf16.msra.mxu0 %v924
        %1181 = vmatpush.bf16.msra.mxu0 %v922
        %1182 = vmatpush.bf16.msra.mxu0 %v920
        %1183 = vmatpush.bf16.msra.mxu0 %v918
        %1184 = vmatpush.bf16.msra.mxu0 %v916
        %1185 = vmatpush.bf16.msra.mxu0 %v914
        %1186 = vmatmul.bf16.gmra.mxu0 %v1156
        %v1187 = vpop.f32.mrf.mxu0
        %v1188 = vadd.f32 %v1169, %v1187
        %v1189 = vpop.f32.mrf.mxu0
        %v1190 = vadd.f32 %v1171, %v1189
        %1191 = vmatmul.bf16.gmra.mxu0 %v1158
        %v1192 = vpop.f32.mrf.mxu0
        %v1193 = vadd.f32 %v1174, %v1192
        %v1194 = vpop.f32.mrf.mxu0
        %v1195 = vadd.f32 %v1176, %v1194
        %1196 = vdwg.mxu0
        %1197 = vmatpush.bf16.msra.mxu0 %v913
        %1198 = vmatpush.bf16.msra.mxu0 %v911
        %1199 = vmatpush.bf16.msra.mxu0 %v909
        %1200 = vmatpush.bf16.msra.mxu0 %v907
        %1201 = vmatpush.bf16.msra.mxu0 %v905
        %1202 = vmatpush.bf16.msra.mxu0 %v903
        %1203 = vmatpush.bf16.msra.mxu0 %v901
        %1204 = vmatpush.bf16.msra.mxu0 %v899
        %1205 = vmatmul.bf16.gmra.mxu0 %v1155
        %v1206 = vpop.f32.mrf.mxu0
        %v1207 = vadd.f32 0.0, %v1206
        %v1208 = vpop.f32.mrf.mxu0
        %v1209 = vadd.f32 0.0, %v1208
        %1210 = vmatmul.bf16.gmra.mxu0 %v1157
        %v1211 = vpop.f32.mrf.mxu0
        %v1212 = vadd.f32 0.0, %v1211
        %v1213 = vpop.f32.mrf.mxu0
        %v1214 = vadd.f32 0.0, %v1213
        %1215 = vdwg.mxu0
        %1216 = vmatpush.bf16.msra.mxu0 %v929
        %1217 = vmatpush.bf16.msra.mxu0 %v927
        %1218 = vmatpush.bf16.msra.mxu0 %v925
        %1219 = vmatpush.bf16.msra.mxu0 %v923
        %1220 = vmatpush.bf16.msra.mxu0 %v921
        %1221 = vmatpush.bf16.msra.mxu0 %v919
        %1222 = vmatpush.bf16.msra.mxu0 %v917
        %1223 = vmatpush.bf16.msra.mxu0 %v915
        %1224 = vmatmul.bf16.gmra.mxu0 %v1156
        %v1225 = vpop.f32.mrf.mxu0
        %v1226 = vadd.f32 %v1207, %v1225
        %v1227 = vpop.f32.mrf.mxu0
        %v1228 = vadd.f32 %v1209, %v1227
        %1229 = vmatmul.bf16.gmra.mxu0 %v1158
        %v1230 = vpop.f32.mrf.mxu0
        %v1231 = vadd.f32 %v1212, %v1230
        %v1232 = vpop.f32.mrf.mxu0
        %v1233 = vadd.f32 %v1214, %v1232
        %1234 = vdwg.mxu0
        %v1235 = vmul.f32 %v1188, %v1039
        %v1236 = vmul.f32 %v1226, %v1040
        %v1237 = vmul.f32 %v1190, %v1039
        %v1238 = vmul.f32 %v1228, %v1040
        %v1239 = vmul.f32 %v1193, %v1039
        %v1240 = vmul.f32 %v1231, %v1040
        %v1241 = vmul.f32 %v1195, %v1039
        %v1242 = vmul.f32 %v1233, %v1040
        %v1243 = vadd.f32 %v1051, %v1235
        %v1244 = vadd.f32 %v1052, %v1236
        %v1245 = vadd.f32 %v1053, %v1237
        %v1246 = vadd.f32 %v1054, %v1238
        %v1247 = vadd.f32 %v1055, %v1239
        %v1248 = vadd.f32 %v1056, %v1240
        %v1249 = vadd.f32 %v1057, %v1241
        %v1250 = vadd.f32 %v1058, %v1242
        %v1251 = vld [vmem:[%s570] sm:$0xff]
        %v1252 = vld [vmem:[%s570 + $0x8] sm:$0xff]
        %v1253 = vld [vmem:[%s570 + $0x10] sm:$0xff]
        %v1254 = vld [vmem:[%s570 + $0x18] sm:$0xff]
        %v1255 = vpack.c.bf16 %v1245, %v1243
        %v1256 = vpack.c.bf16 %v1246, %v1244
        %v1257 = vpack.c.bf16 %v1249, %v1247
        %v1258 = vpack.c.bf16 %v1250, %v1248
        %v1263 = vunpack.c.l.b16 %v1251
        %v1264 = vunpack.c.h.b16 %v1251
        %v1265 = vunpack.c.l.b16 %v1252
        %v1266 = vunpack.c.h.b16 %v1252
        %v1267 = vunpack.c.l.b16 %v1253
        %v1268 = vunpack.c.h.b16 %v1253
        %v1269 = vunpack.c.l.b16 %v1254
        %v1270 = vunpack.c.h.b16 %v1254
        %v1271 = vpack.c.b16 %v1265, %v1263
        %v1272 = vpack.c.b16 %v1266, %v1264
        %v1273 = vpack.c.b16 %v1269, %v1267
        %v1274 = vpack.c.b16 %v1270, %v1268
        %1279 = vmatpush.bf16.xpose.msra.mxu0 0
        %1280 = vmatpush.bf16.xpose.msra.mxu0 0
        %1281 = vmatpush.bf16.xpose.msra.mxu0 0
        %1282 = vmatpush.bf16.xpose.msra.mxu0 0
        %1283 = vmatpush.bf16.xpose.msra.mxu0 0
        %1284 = vmatpush.bf16.xpose.msra.mxu0 0
        %1285 = vmatpush.bf16.xpose.msra.mxu0 %v1257
        %1286 = vmatpush.bf16.xpose.msra.mxu0 %v1255
        %1287 = vmatmul.bf16.gmra.mxu0 %v1271
        %v1288 = vpop.f32.mrf.mxu0
        %v1289 = vadd.f32 0.0, %v1288
        %v1290 = vpop.f32.mrf.mxu0
        %v1291 = vadd.f32 0.0, %v1290
        %1292 = vmatmul.bf16.gmra.mxu0 %v1273
        %v1293 = vpop.f32.mrf.mxu0
        %v1294 = vadd.f32 0.0, %v1293
        %v1295 = vpop.f32.mrf.mxu0
        %v1296 = vadd.f32 0.0, %v1295
        %1297 = vdwg.mxu0
        %1298 = vmatpush.bf16.xpose.msra.mxu0 0
        %1299 = vmatpush.bf16.xpose.msra.mxu0 0
        %1300 = vmatpush.bf16.xpose.msra.mxu0 0
        %1301 = vmatpush.bf16.xpose.msra.mxu0 0
        %1302 = vmatpush.bf16.xpose.msra.mxu0 0
        %1303 = vmatpush.bf16.xpose.msra.mxu0 0
        %1304 = vmatpush.bf16.xpose.msra.mxu0 %v1258
        %1305 = vmatpush.bf16.xpose.msra.mxu0 %v1256
        %1306 = vmatmul.bf16.gmra.mxu0 %v1272
        %v1307 = vpop.f32.mrf.mxu0
        %v1308 = vadd.f32 %v1289, %v1307
        %v1309 = vpop.f32.mrf.mxu0
        %v1310 = vadd.f32 %v1291, %v1309
        %1311 = vmatmul.bf16.gmra.mxu0 %v1274
        %v1312 = vpop.f32.mrf.mxu0
        %v1313 = vadd.f32 %v1294, %v1312
        %v1314 = vpop.f32.mrf.mxu0
        %v1315 = vadd.f32 %v1296, %v1314
        %1316 = vdwg.mxu0
        %v1317 = vld [vmem:[%s655] sm:$0xff]
        %v1318 = vld [vmem:[%s655 + $0x8] sm:$0xff]
        %v1319 = vld [vmem:[%s655 + $0x10] sm:$0xff]
        %v1320 = vld [vmem:[%s655 + $0x18] sm:$0xff]
        %1322 = vset.pattern.permute.xlu0 0
        %1323 = vperm.xlu0 %1322, %v1317
        %v1324 = vpop.permute.xlu0 %1323
        %1327 = vset.pattern.permute.xlu0 0
        %1328 = vperm.xlu0 %1327, %v1318
        %v1329 = vpop.permute.xlu0 %1328
        %1332 = vset.pattern.permute.xlu0 0
        %1333 = vperm.xlu0 %1332, %v1319
        %v1334 = vpop.permute.xlu0 %1333
        %1337 = vset.pattern.permute.xlu0 0
        %1338 = vperm.xlu0 %1337, %v1320
        %v1339 = vpop.permute.xlu0 %1338
        %v1341 = vmul.f32 %v1308, %v1324
        %v1342 = vmul.f32 %v1310, %v1329
        %v1343 = vmul.f32 %v1313, %v1334
        %v1344 = vmul.f32 %v1315, %v1339
        %v1345 = vld [vmem:[%s660] sm:$0xff]
        %v1346 = vld [vmem:[%s660 + $0x8] sm:$0xff]
        %v1347 = vld [vmem:[%s660 + $0x10] sm:$0xff]
        %v1348 = vld [vmem:[%s660 + $0x18] sm:$0xff]
        %v1349 = vld [vmem:[%s8] sm:$0x1]
        %1351 = vset.pattern.permute.xlu0 0
        %1352 = vperm.xlu0 %1351, %v1345
        %v1353 = vpop.permute.xlu0 %1352
        %1356 = vset.pattern.permute.xlu0 0
        %1357 = vperm.xlu0 %1356, %v1346
        %v1358 = vpop.permute.xlu0 %1357
        %1361 = vset.pattern.permute.xlu0 0
        %1362 = vperm.xlu0 %1361, %v1347
        %v1363 = vpop.permute.xlu0 %1362
        %1366 = vset.pattern.permute.xlu0 0
        %1367 = vperm.xlu0 %1366, %v1348
        %v1368 = vpop.permute.xlu0 %1367
        %v1370 = vperm.slane %v1349, 0
        %v1371 = vmul.f32 %v1353, %v1370
        %v1372 = vmul.f32 %v1358, %v1370
        %v1373 = vmul.f32 %v1363, %v1370
        %v1374 = vmul.f32 %v1368, %v1370
        %v1375 = vld [vmem:[%s8 + $0x1] sm:$0x1]
        %1376 = vset.pattern.permute.xlu0 1
        %1377 = vperm.xlu0 %1376, %v1345
        %v1378 = vpop.permute.xlu0 %1377
        %1380 = vset.pattern.permute.xlu0 1
        %1381 = vperm.xlu0 %1380, %v1346
        %v1382 = vpop.permute.xlu0 %1381
        %1384 = vset.pattern.permute.xlu0 1
        %1385 = vperm.xlu0 %1384, %v1347
        %v1386 = vpop.permute.xlu0 %1385
        %1388 = vset.pattern.permute.xlu0 1
        %1389 = vperm.xlu0 %1388, %v1348
        %v1390 = vpop.permute.xlu0 %1389
        %v1392 = vperm.slane %v1375, 0
        %v1393 = vmul.f32 %v1378, %v1392
        %v1394 = vmul.f32 %v1382, %v1392
        %v1395 = vmul.f32 %v1386, %v1392
        %v1396 = vmul.f32 %v1390, %v1392
        %v1397 = vadd.f32 %v1371, %v1393
        %v1398 = vadd.f32 %v1372, %v1394
        %v1399 = vadd.f32 %v1373, %v1395
        %v1400 = vadd.f32 %v1374, %v1396
        %v1401 = vpack.c.bf16 %v1342, %v1341
        %v1402 = vpack.c.bf16 %v1344, %v1343
        %v1403 = vld [vmem:[%s9] sm:$0xf]
        %v1404 = vld [vmem:[%s9 + $0x4] sm:$0xf]
        %v1405 = vld [vmem:[%s9 + $0x8] sm:$0xf]
        %v1406 = vld [vmem:[%s9 + $0xc] sm:$0xf]
        %v1411 = vunpack.c.l.b16 %v1403
        %v1412 = vunpack.c.l.b16 %v1404
        %v1413 = vunpack.c.l.b16 %v1405
        %v1414 = vunpack.c.l.b16 %v1406
        %v1415 = vpack.c.b16 %v1412, %v1411
        %v1416 = vpack.c.b16 %v1414, %v1413
        %v1420 = vsel %vm745, %v1401, 0
        %v1423 = vsel %vm745, %v1402, 0
        %1425 = vmatpush.bf16.msra.mxu0 0
        %1426 = vmatpush.bf16.msra.mxu0 0
        %1427 = vmatpush.bf16.msra.mxu0 0
        %1428 = vmatpush.bf16.msra.mxu0 0
        %1429 = vmatpush.bf16.msra.mxu0 0
        %1430 = vmatpush.bf16.msra.mxu0 0
        %1431 = vmatpush.bf16.msra.mxu0 %v1416
        %1432 = vmatpush.bf16.msra.mxu0 %v1415
        %1433 = vmatmul.bf16.gmra.mxu0 %v1420
        %v1434 = vpop.f32.mrf.mxu0
        %v1435 = vadd.f32 0.0, %v1434
        %v1436 = vpop.f32.mrf.mxu0
        %v1437 = vadd.f32 0.0, %v1436
        %1438 = vmatmul.bf16.gmra.mxu0 %v1423
        %v1439 = vpop.f32.mrf.mxu0
        %v1440 = vadd.f32 0.0, %v1439
        %v1441 = vpop.f32.mrf.mxu0
        %v1442 = vadd.f32 0.0, %v1441
        %1443 = vdwg.mxu0
        %v1444 = vadd.f32 %v1397, %v1435
        %v1445 = vadd.f32 %v1398, %v1437
        %v1446 = vadd.f32 %v1399, %v1440
        %v1447 = vadd.f32 %v1400, %v1442
        %v1448 = vld [vmem:[%s11] sm:$0x1]
        %v1450 = vperm.slane %v1448, 0
        %v1452 = vadd.f32 %v1444, %v1450
        %v1453 = vadd.f32 %v1445, %v1450
        %v1454 = vadd.f32 %v1446, %v1450
        %v1455 = vadd.f32 %v1447, %v1450
        %v1456 = vmax.f32 %v1452, 0.0
        %v1457 = vmax.f32 %v1453, 0.0
        %v1458 = vmax.f32 %v1454, 0.0
        %v1459 = vmax.f32 %v1455, 0.0
        %v1460 = vpack.c.bf16 %v1457, %v1456
        %v1461 = vpack.c.bf16 %v1459, %v1458
        %v1462 = vld [vmem:[%s10] sm:$0xf]
        %v1463 = vld [vmem:[%s10 + $0x4] sm:$0xf]
        %v1464 = vld [vmem:[%s10 + $0x8] sm:$0xf]
        %v1465 = vld [vmem:[%s10 + $0xc] sm:$0xf]
        %v1466 = vld [vmem:[%s10 + $0x10] sm:$0xf]
        %v1467 = vld [vmem:[%s10 + $0x14] sm:$0xf]
        %v1468 = vld [vmem:[%s10 + $0x18] sm:$0xf]
        %v1469 = vld [vmem:[%s10 + $0x1c] sm:$0xf]
        %v1470 = vld [vmem:[%s10 + $0x20] sm:$0xf]
        %v1471 = vld [vmem:[%s10 + $0x24] sm:$0xf]
        %v1472 = vld [vmem:[%s10 + $0x28] sm:$0xf]
        %v1473 = vld [vmem:[%s10 + $0x2c] sm:$0xf]
        %v1474 = vld [vmem:[%s10 + $0x30] sm:$0xf]
        %v1475 = vld [vmem:[%s10 + $0x34] sm:$0xf]
        %v1476 = vld [vmem:[%s10 + $0x38] sm:$0xf]
        %v1477 = vld [vmem:[%s10 + $0x3c] sm:$0xf]
        %s1478 = scalar_lea.vmem %s11, 1
        %v1479 = vld [vmem:[%s1478] sm:$0x1]
        %v1481 = vperm.slane %v1479, 0
        %v1499 = vunpack.c.l.b16 %v1462
        %v1500 = vunpack.c.l.b16 %v1463
        %v1501 = vunpack.c.l.b16 %v1464
        %v1502 = vunpack.c.l.b16 %v1465
        %v1503 = vunpack.c.l.b16 %v1466
        %v1504 = vunpack.c.l.b16 %v1467
        %v1505 = vunpack.c.l.b16 %v1468
        %v1506 = vunpack.c.l.b16 %v1469
        %v1507 = vunpack.c.l.b16 %v1470
        %v1508 = vunpack.c.l.b16 %v1471
        %v1509 = vunpack.c.l.b16 %v1472
        %v1510 = vunpack.c.l.b16 %v1473
        %v1511 = vunpack.c.l.b16 %v1474
        %v1512 = vunpack.c.l.b16 %v1475
        %v1513 = vunpack.c.l.b16 %v1476
        %v1514 = vunpack.c.l.b16 %v1477
        %v1515 = vpack.c.b16 %v1500, %v1499
        %v1516 = vpack.c.b16 %v1502, %v1501
        %v1517 = vpack.c.b16 %v1504, %v1503
        %v1518 = vpack.c.b16 %v1506, %v1505
        %v1519 = vpack.c.b16 %v1508, %v1507
        %v1520 = vpack.c.b16 %v1510, %v1509
        %v1521 = vpack.c.b16 %v1512, %v1511
        %v1522 = vpack.c.b16 %v1514, %v1513
        %1531 = vmatpush.bf16.msra.mxu0 %v1522
        %1532 = vmatpush.bf16.msra.mxu0 %v1521
        %1533 = vmatpush.bf16.msra.mxu0 %v1520
        %1534 = vmatpush.bf16.msra.mxu0 %v1519
        %1535 = vmatpush.bf16.msra.mxu0 %v1518
        %1536 = vmatpush.bf16.msra.mxu0 %v1517
        %1537 = vmatpush.bf16.msra.mxu0 %v1516
        %1538 = vmatpush.bf16.msra.mxu0 %v1515
        %1539 = vmatmul.bf16.gmra.mxu0 %v1460
        %v1540 = vpop.f32.mrf.mxu0
        %v1541 = vadd.f32 %v1481, %v1540
        %v1542 = vpop.f32.mrf.mxu0
        %v1543 = vadd.f32 %v1481, %v1542
        %1544 = vmatmul.bf16.gmra.mxu0 %v1461
        %v1545 = vpop.f32.mrf.mxu0
        %v1546 = vadd.f32 %v1481, %v1545
        %v1547 = vpop.f32.mrf.mxu0
        %v1548 = vadd.f32 %v1481, %v1547
        %1549 = vdwg.mxu0
        %v1550 = vmax.f32 %v1541, 0.0
        %v1551 = vmax.f32 %v1543, 0.0
        %v1552 = vmax.f32 %v1546, 0.0
        %v1553 = vmax.f32 %v1548, 0.0
        %v1554 = vpack.c.bf16 %v1551, %v1550
        %v1555 = vpack.c.bf16 %v1553, %v1552
        %v1556 = vld [vmem:[#allocation10] sm:$0xf]
        %v1557 = vld [vmem:[#allocation10 + $0x4] sm:$0xf]
        %v1558 = vld [vmem:[#allocation10 + $0x8] sm:$0xf]
        %v1559 = vld [vmem:[#allocation10 + $0xc] sm:$0xf]
        %v1560 = vld [vmem:[#allocation10 + $0x10] sm:$0xf]
        %v1561 = vld [vmem:[#allocation10 + $0x14] sm:$0xf]
        %v1562 = vld [vmem:[#allocation10 + $0x18] sm:$0xf]
        %v1563 = vld [vmem:[#allocation10 + $0x1c] sm:$0xf]
        %v1564 = vld [vmem:[#allocation10 + $0x20] sm:$0xf]
        %v1565 = vld [vmem:[#allocation10 + $0x24] sm:$0xf]
        %v1566 = vld [vmem:[#allocation10 + $0x28] sm:$0xf]
        %v1567 = vld [vmem:[#allocation10 + $0x2c] sm:$0xf]
        %v1568 = vld [vmem:[#allocation10 + $0x30] sm:$0xf]
        %v1569 = vld [vmem:[#allocation10 + $0x34] sm:$0xf]
        %v1570 = vld [vmem:[#allocation10 + $0x38] sm:$0xf]
        %v1571 = vld [vmem:[#allocation10 + $0x3c] sm:$0xf]
        %v1572 = vld [vmem:[%s13] sm:$0x1]
        %v1574 = vperm.slane %v1572, 0
        %v1592 = vunpack.c.l.b16 %v1556
        %v1593 = vunpack.c.l.b16 %v1557
        %v1594 = vunpack.c.l.b16 %v1558
        %v1595 = vunpack.c.l.b16 %v1559
        %v1596 = vunpack.c.l.b16 %v1560
        %v1597 = vunpack.c.l.b16 %v1561
        %v1598 = vunpack.c.l.b16 %v1562
        %v1599 = vunpack.c.l.b16 %v1563
        %v1600 = vunpack.c.l.b16 %v1564
        %v1601 = vunpack.c.l.b16 %v1565
        %v1602 = vunpack.c.l.b16 %v1566
        %v1603 = vunpack.c.l.b16 %v1567
        %v1604 = vunpack.c.l.b16 %v1568
        %v1605 = vunpack.c.l.b16 %v1569
        %v1606 = vunpack.c.l.b16 %v1570
        %v1607 = vunpack.c.l.b16 %v1571
        %v1608 = vpack.c.b16 %v1593, %v1592
        %v1609 = vpack.c.b16 %v1595, %v1594
        %v1610 = vpack.c.b16 %v1597, %v1596
        %v1611 = vpack.c.b16 %v1599, %v1598
        %v1612 = vpack.c.b16 %v1601, %v1600
        %v1613 = vpack.c.b16 %v1603, %v1602
        %v1614 = vpack.c.b16 %v1605, %v1604
        %v1615 = vpack.c.b16 %v1607, %v1606
        %1624 = vmatpush.bf16.msra.mxu0 %v1615
        %1625 = vmatpush.bf16.msra.mxu0 %v1614
        %1626 = vmatpush.bf16.msra.mxu0 %v1613
        %1627 = vmatpush.bf16.msra.mxu0 %v1612
        %1628 = vmatpush.bf16.msra.mxu0 %v1611
        %1629 = vmatpush.bf16.msra.mxu0 %v1610
        %1630 = vmatpush.bf16.msra.mxu0 %v1609
        %1631 = vmatpush.bf16.msra.mxu0 %v1608
        %1632 = vmatmul.bf16.gmra.mxu0 %v1554
        %v1633 = vpop.f32.mrf.mxu0
        %v1634 = vadd.f32 %v1574, %v1633
        %v1635 = vpop.f32.mrf.mxu0
        %v1636 = vadd.f32 %v1574, %v1635
        %1637 = vmatmul.bf16.gmra.mxu0 %v1555
        %v1638 = vpop.f32.mrf.mxu0
        %v1639 = vadd.f32 %v1574, %v1638
        %v1640 = vpop.f32.mrf.mxu0
        %v1641 = vadd.f32 %v1574, %v1640
        %1642 = vdwg.mxu0
        %1643 = vst [vmem:[%s645] sm:$0xff] %v1634
        %1644 = vst [vmem:[%s645 + $0x8] sm:$0xff] %v1636
        %1645 = vst [vmem:[%s645 + $0x10] sm:$0xff] %v1639
        %1646 = vst [vmem:[%s645 + $0x18] sm:$0xff] %v1641
        %s1647 = sand.u32 %s369, 1
        %s1648 = scalar_lea.sflag [#allocation4], %s1647
        %s1649 = sand.u32 %s369, 1
        %s1650 = smul.addr %s1649, 32
        %s1651 = scalar_lea.vmem [#allocation11], %s1650
        // Predicated region
        $region97: #{tpu_custom_call.1} parent=75 // pred_check
          %p1652 = pneg %p379
        $region98: #{tpu_custom_call.1} parent=75 // pred_check_branch
          %1654 = sbr.rel (%p1652) target = $region100
        $region99: #{tpu_custom_call.1} parent=75 // pred_region
          %1656 = vsyncadd %s1648, 0
          %s1657 = smul.addr %s37, 4
          %s1658 = smul.addr %s1657, 8
          %s1659 = scalar_lea.hbm %s14, %s1658
          %s1660 = sshll.u32 %s1651, 4
          %s1661 = int_to_ptr.vmem [resolvable:$true] %s1660
          %s1662 = sshll.u32 %s1659, 4
          %s1663 = int_to_ptr.hbm [resolvable:$true] %s1662
          %1668 = dma.vmem_to_hbm [thread:$0]  %s1661, 512, %s1663, %s1648, 128, 128, 8
        $region100: #{tpu_custom_call.1} parent=75 // pred_fallthru
          _
      $region76: #{tpu_custom_call.1} parent=5 // pred_fallthru
        _
      %p1669 = scmp.le.s32.totalorder 2, %s32
      // Predicated region
      $region101: #{tpu_custom_call.1} parent=5 // pred_check
        %p1670 = pneg %p1669
      $region102: #{tpu_custom_call.1} parent=5 // pred_check_branch
        %1672 = sbr.rel (%p1670) target = $region104
      $region103: #{tpu_custom_call.1} parent=5 // pred_region
        %s1673 = ssub.s32 %s32, 2
        // Predicated region
        $region105: #{tpu_custom_call.1} parent=103 // pred_check
          %p1674 = pneg %p385
        $region106: #{tpu_custom_call.1} parent=103 // pred_check_branch
          %1676 = sbr.rel (%p1674) target = $region108
        $region107: #{tpu_custom_call.1} parent=103 // pred_region
          %s1677 = sand.u32 %s370, 1
          %s1678 = scalar_lea.sflag [#allocation4], %s1677
          %s1679 = sand.u32 %s370, 1
          %s1680 = smul.addr %s1679, 32
          %s1681 = scalar_lea.vmem [#allocation11], %s1680
          %1683 = dma.done %s1678, 512
        $region108: #{tpu_custom_call.1} parent=103 // pred_fallthru
          _
      $region104: #{tpu_custom_call.1} parent=5 // pred_fallthru
        _
    $region6: #{tpu_custom_call.1} parent=1 // loop_footer
      %s36 = sadd.s32 1, %s32
    $region7: #{tpu_custom_call.1} parent=1 // loop_footer_branch
      %31 = sbr.rel target = $region3
    $region8: #{tpu_custom_call.1} parent=1 // loop_exit
      _
    %1684 = vsyncpa [#allocation3], 1
    %s1685 = scalar_lea.sflag [#allocation3], 1
    %1686 = vsyncpa %s1685, 1
    %1687 = vsyncpa [#allocation6], 1
    %s1688 = scalar_lea.sflag [#allocation6], 1
    %1689 = vsyncpa %s1688, 1
    %1690 = vsyncpa [#allocation9], 1
    %s1691 = scalar_lea.sflag [#allocation9], 1
    %1692 = vsyncpa %s1691, 1
    %1693 = vsyncpa [#allocation4], 1
    %s1694 = scalar_lea.sflag [#allocation4], 1
    %1695 = vsyncpa %s1694, 1

</llo_original>
